<compile_context>
chip_gen: v7x
topology: tpu7x:2x2x1
jax: 0.10.0
libtpu: 0.0.40
codegen_flags: <defaults>
</compile_context>

<pallas_src>
import numpy as np
import jax
import jax.numpy as jnp
from jax import lax
from jax.experimental import pallas as pl
from jax.experimental.pallas import tpu as pltpu

CFG = [8, "M", 16, "M", 32, 32, "M"]   # scaled-down VGG-style features config
IN_CH = 3


def _round_up(x, m):
    return (x + m - 1) // m * m


# ---------------------------------------------------------------------------
# In-kernel building blocks.  They operate on ONE image in channel-major flat
# layout: activation value of shape (C, H*W), spatial axis on the 128 lanes.
# ---------------------------------------------------------------------------
def _conv3x3_relu(act, wmat, bias, edge, w):
    """3x3 / stride 1 / pad 1 conv + bias + ReLU as a single MXU matmul.

    act  : (Cin, H*W)     spatial flattened row-major (index = y*W + x)
    wmat : (Cout, 9*Cin)  weights, tap-major (k = dy*3 + dx), channel-minor
    bias : (Cout, 1)
    edge : (2, H*W)       0/1 masks: row 0 zeroes x==0 (left taps), row 1
                          zeroes x==W-1 (right taps) -- the horizontal-wrap
                          columns of the flat-shift trick.
    """
    c, hw = act.shape
    p = _round_up(w + 1, 128)                   # lane-aligned zero padding
    zpad = jnp.zeros((c, p), jnp.float32)
    apad = jnp.concatenate([zpad, act, zpad], axis=1)       # (C, H*W + 2p)
    left = edge[0:1, :]
    right = edge[1:2, :]
    slabs = []
    for dy in range(3):
        for dx in range(3):
            off = (dy - 1) * w + (dx - 1)       # flat shift for this tap
            s = apad[:, p + off:p + off + hw]   # (C, H*W) static lane slice
            if dx == 0:
                s = s * left
            elif dx == 2:
                s = s * right
            slabs.append(s)
    cols = jnp.concatenate(slabs, axis=0)       # (9*Cin, H*W) im2col in VMEM
    out = jnp.dot(wmat, cols, preferred_element_type=jnp.float32)
    return jnp.maximum(out + bias, 0.0)         # (Cout, H*W)


def _maxpool2x2(act, sel, w):
    """2x2 / stride 2 maxpool: 3 VPU maxes + one 0/1 selection matmul.

    act : (C, H*W) post-ReLU activation.
    sel : (H*W - W - 1, (H/2)*(W/2)) constant 0/1 matrix picking rows
          i = 2*y*W + 2*x (exact selection, built host-side).
    """
    c, hw = act.shape
    n = hw - w - 1                              # last needed window start + 1
    m = jnp.maximum(
        jnp.maximum(act[:, 0:n], act[:, 1:n + 1]),
        jnp.maximum(act[:, w:w + n], act[:, w + 1:w + 1 + n]))
    return jnp.dot(m, sel, preferred_element_type=jnp.float32)


# ---------------------------------------------------------------------------
# Forward pass: one fused Pallas kernel for the whole feature stack.
# ---------------------------------------------------------------------------
def my_vgg_forward(x_nchw, params):
    """Pallas implementation of MyVGG.forward (vgg.features).  NCHW in/out."""
    n, c_in, h0, w0 = x_nchw.shape
    c0 = _round_up(c_in, 8)                     # pad channels to a sublane tile
    hw0 = h0 * w0

    # --- static walk over CFG: per-layer operands (weights / masks) ---------
    operands = []      # arrays fed to the fused kernel (after the image)
    layers = []        # ("conv", W) / ("pool", W): drives the unrolled body
    cur_c, cur_h, cur_w = c0, h0, w0
    pi = 0
    for v in CFG:
        if v == "M":
            assert cur_h % 2 == 0 and cur_w % 2 == 0
            ho, wo = cur_h // 2, cur_w // 2
            nsel = cur_h * cur_w - cur_w - 1
            sel = np.zeros((nsel, ho * wo), np.float32)
            for ry in range(ho):
                for rx in range(wo):
                    sel[2 * ry * cur_w + 2 * rx, ry * wo + rx] = 1.0
            operands.append(jnp.asarray(sel))
            layers.append(("pool", cur_w))
            cur_h, cur_w = ho, wo
        else:
            w_hwio, b = params[pi]
            pi += 1
            kh, kw, cin, cout = w_hwio.shape
            assert (kh, kw) == (3, 3)
            cin_p = _round_up(cin, 8)
            assert cin_p == cur_c               # matches activation channels
            wp = jnp.pad(w_hwio, ((0, 0), (0, 0), (0, cin_p - cin), (0, 0)))
            wmat = jnp.transpose(wp, (3, 0, 1, 2)).reshape(cout, 9 * cin_p)
            bias = jnp.reshape(b, (cout, 1))
            xs = np.arange(cur_h * cur_w) % cur_w
            edge = np.ones((2, cur_h * cur_w), np.float32)
            edge[0, xs == 0] = 0.0
            edge[1, xs == cur_w - 1] = 0.0
            operands += [wmat, bias, jnp.asarray(edge)]
            layers.append(("conv", cur_w))
            cur_c = cout
    c_out, h_out, w_out = cur_c, cur_h, cur_w

    # --- input: NCHW -> (N, Cpad, H*W) (tiny one-time channel zero-pad) -----
    x_flat = jnp.pad(x_nchw.reshape(n, c_in, hw0),
                     ((0, 0), (0, c0 - c_in), (0, 0)))

    # --- the fused kernel: whole feature stack for one image per grid step --
    def kernel(*refs):
        x_ref, o_ref = refs[0], refs[-1]
        ops = refs[1:-1]
        act = x_ref[0]                          # (Cpad, H0*W0), lanes = spatial
        oi = 0
        for kind, lw in layers:                 # statically unrolled
            if kind == "conv":
                act = _conv3x3_relu(act, ops[oi][...], ops[oi + 1][...],
                                    ops[oi + 2][...], lw)
                oi += 3
            else:
                act = _maxpool2x2(act, ops[oi][...], lw)
                oi += 1
        o_ref[0] = act                          # (C_out, Hout*Wout)

    in_specs = [pl.BlockSpec((1, c0, hw0), lambda i: (i, 0, 0))]
    in_specs += [pl.BlockSpec(op.shape, lambda i: (0, 0)) for op in operands]

    out_flat = pl.pallas_call(
        kernel,
        out_shape=jax.ShapeDtypeStruct((n, c_out, h_out * w_out), jnp.float32),
        grid=(n,),
        in_specs=in_specs,
        out_specs=pl.BlockSpec((1, c_out, h_out * w_out), lambda i: (i, 0, 0)),
        compiler_params=pltpu.CompilerParams(
            dimension_semantics=("parallel",)),
    )(x_flat, *operands)

    return out_flat.reshape(n, c_out, h_out, w_out)      # NCHW


# ---------------------------------------------------------------------------
# Deterministic parameters + pure-JAX reference (PyTorch semantics).
# ---------------------------------------------------------------------------
def init_params(key):
    params = []
    cin = IN_CH
    for v in CFG:
        if v == "M":
            continue
        key, kw, kb = jax.random.split(key, 3)
        w = jax.random.normal(kw, (3, 3, cin, v), jnp.float32) * np.sqrt(2.0 / (9 * cin))
        b = jax.random.normal(kb, (v,), jnp.float32) * 0.01
        params.append((w, b))
        cin = v
    return params


def my_vgg_reference(x_nchw, params):
    """Pure-JAX reference (matches PyTorch Conv2d/ReLU/MaxPool2d semantics)."""
    x = jnp.transpose(x_nchw, (0, 2, 3, 1))
    pi = 0
    for v in CFG:
        if v == "M":
            x = lax.reduce_window(x, -jnp.inf, lax.max,
                                  (1, 2, 2, 1), (1, 2, 2, 1), "VALID")
        else:
            w, b = params[pi]
            x = lax.conv_general_dilated(
                x, w, (1, 1), "SAME",
                dimension_numbers=("NHWC", "HWIO", "NHWC"),
                precision=lax.Precision.HIGHEST) + b
            x = jnp.maximum(x, 0.0)
            pi += 1
    return jnp.transpose(x, (0, 3, 1, 2))


if __name__ == "__main__":
    key = jax.random.PRNGKey(0)
    key, kx = jax.random.split(key)
    x = jax.random.normal(kx, (2, IN_CH, 16, 16), jnp.float32)   # NCHW like PyTorch
    params = init_params(key)

    out = jax.block_until_ready(jax.jit(my_vgg_forward)(x, params))
    ref = jax.block_until_ready(my_vgg_reference(x, params))

    assert out.shape == ref.shape == (2, 32, 2, 2), out.shape
    if not np.allclose(np.asarray(out), np.asarray(ref), rtol=5e-4, atol=5e-4):
        raise AssertionError("Pallas VGG features mismatch vs reference")
    print("KERNEL_OK")
</pallas_src>

<mosaic_0001>
module attributes {stable_mosaic.version = 11 : i64} {
  func.func @kernel(%arg0: i32, %arg1: memref<1x8x256xf32, #tpu.memory_space<vmem>>, %arg2: memref<8x72xf32, #tpu.memory_space<vmem>>, %arg3: memref<8x1xf32, #tpu.memory_space<vmem>>, %arg4: memref<2x256xf32, #tpu.memory_space<vmem>>, %arg5: memref<239x64xf32, #tpu.memory_space<vmem>>, %arg6: memref<16x72xf32, #tpu.memory_space<vmem>>, %arg7: memref<16x1xf32, #tpu.memory_space<vmem>>, %arg8: memref<2x64xf32, #tpu.memory_space<vmem>>, %arg9: memref<55x16xf32, #tpu.memory_space<vmem>>, %arg10: memref<32x144xf32, #tpu.memory_space<vmem>>, %arg11: memref<32x1xf32, #tpu.memory_space<vmem>>, %arg12: memref<2x16xf32, #tpu.memory_space<vmem>>, %arg13: memref<32x288xf32, #tpu.memory_space<vmem>>, %arg14: memref<32x1xf32, #tpu.memory_space<vmem>>, %arg15: memref<2x16xf32, #tpu.memory_space<vmem>>, %arg16: memref<11x4xf32, #tpu.memory_space<vmem>>, %arg17: memref<1x32x4xf32, #tpu.memory_space<vmem>>) attributes {dimension_semantics = [#tpu.dimension_semantics<parallel>], iteration_bounds = array<i64: 2>, scalar_prefetch = 0 : i64, scratch_operands = 0 : i64, tpu.core_type = #tpu.core_type<tc>, window_params = [{transform_indices = @transform_0, window_bounds = array<i64: 1, 8, 256>}, {pipeline_mode = #tpu.pipeline_mode<synchronous>, transform_indices = @transform_1, window_bounds = array<i64: 8, 72>}, {pipeline_mode = #tpu.pipeline_mode<synchronous>, transform_indices = @transform_2, window_bounds = array<i64: 8, 1>}, {pipeline_mode = #tpu.pipeline_mode<synchronous>, transform_indices = @transform_3, window_bounds = array<i64: 2, 256>}, {pipeline_mode = #tpu.pipeline_mode<synchronous>, transform_indices = @transform_4, window_bounds = array<i64: 239, 64>}, {pipeline_mode = #tpu.pipeline_mode<synchronous>, transform_indices = @transform_5, window_bounds = array<i64: 16, 72>}, {pipeline_mode = #tpu.pipeline_mode<synchronous>, transform_indices = @transform_6, window_bounds = array<i64: 16, 1>}, {pipeline_mode = #tpu.pipeline_mode<synchronous>, transform_indices = @transform_7, window_bounds = array<i64: 2, 64>}, {pipeline_mode = #tpu.pipeline_mode<synchronous>, transform_indices = @transform_8, window_bounds = array<i64: 55, 16>}, {pipeline_mode = #tpu.pipeline_mode<synchronous>, transform_indices = @transform_9, window_bounds = array<i64: 32, 144>}, {pipeline_mode = #tpu.pipeline_mode<synchronous>, transform_indices = @transform_10, window_bounds = array<i64: 32, 1>}, {pipeline_mode = #tpu.pipeline_mode<synchronous>, transform_indices = @transform_11, window_bounds = array<i64: 2, 16>}, {pipeline_mode = #tpu.pipeline_mode<synchronous>, transform_indices = @transform_12, window_bounds = array<i64: 32, 288>}, {pipeline_mode = #tpu.pipeline_mode<synchronous>, transform_indices = @transform_13, window_bounds = array<i64: 32, 1>}, {pipeline_mode = #tpu.pipeline_mode<synchronous>, transform_indices = @transform_14, window_bounds = array<i64: 2, 16>}, {pipeline_mode = #tpu.pipeline_mode<synchronous>, transform_indices = @transform_15, window_bounds = array<i64: 11, 4>}, {transform_indices = @transform_16, window_bounds = array<i64: 1, 32, 4>}]} {
    %c0 = arith.constant 0 : index
    %c0_0 = arith.constant 0 : index
    %c0_1 = arith.constant 0 : index
    %0 = vector.load %arg1[%c0, %c0_0, %c0_1] : memref<1x8x256xf32, #tpu.memory_space<vmem>>, vector<1x8x256xf32>
    %1 = vector.shape_cast %0 : vector<1x8x256xf32> to vector<8x256xf32>
    %c0_2 = arith.constant 0 : index
    %c0_3 = arith.constant 0 : index
    %2 = vector.load %arg2[%c0_2, %c0_3] : memref<8x72xf32, #tpu.memory_space<vmem>>, vector<8x72xf32>
    %c0_4 = arith.constant 0 : index
    %c0_5 = arith.constant 0 : index
    %3 = vector.load %arg3[%c0_4, %c0_5] : memref<8x1xf32, #tpu.memory_space<vmem>>, vector<8x1xf32>
    %c0_6 = arith.constant 0 : index
    %c0_7 = arith.constant 0 : index
    %4 = vector.load %arg4[%c0_6, %c0_7] : memref<2x256xf32, #tpu.memory_space<vmem>>, vector<2x256xf32>
    %cst = arith.constant 0.000000e+00 : f32
    %5 = vector.broadcast %cst : f32 to vector<8x128xf32>
    %6 = tpu.concatenate %5, %1, %5 in 1 : vector<8x128xf32>, vector<8x256xf32>, vector<8x128xf32> -> vector<8x512xf32>
    %7 = vector.extract_strided_slice %4 {offsets = [0, 0], sizes = [1, 256], strides = [1, 1]} : vector<2x256xf32> to vector<1x256xf32>
    %8 = vector.extract_strided_slice %4 {offsets = [1, 0], sizes = [1, 256], strides = [1, 1]} : vector<2x256xf32> to vector<1x256xf32>
    %9 = vector.extract_strided_slice %6 {offsets = [0, 111], sizes = [8, 256], strides = [1, 1]} : vector<8x512xf32> to vector<8x256xf32>
    %10 = vector.broadcast %7 : vector<1x256xf32> to vector<8x256xf32>
    %11 = arith.mulf %9, %10 : vector<8x256xf32>
    %12 = vector.extract_strided_slice %6 {offsets = [0, 112], sizes = [8, 256], strides = [1, 1]} : vector<8x512xf32> to vector<8x256xf32>
    %13 = vector.extract_strided_slice %6 {offsets = [0, 113], sizes = [8, 256], strides = [1, 1]} : vector<8x512xf32> to vector<8x256xf32>
    %14 = vector.broadcast %8 : vector<1x256xf32> to vector<8x256xf32>
    %15 = arith.mulf %13, %14 : vector<8x256xf32>
    %16 = vector.extract_strided_slice %6 {offsets = [0, 127], sizes = [8, 256], strides = [1, 1]} : vector<8x512xf32> to vector<8x256xf32>
    %17 = vector.broadcast %7 : vector<1x256xf32> to vector<8x256xf32>
    %18 = arith.mulf %16, %17 : vector<8x256xf32>
    %19 = vector.extract_strided_slice %6 {offsets = [0, 128], sizes = [8, 256], strides = [1, 1]} : vector<8x512xf32> to vector<8x256xf32>
    %20 = vector.extract_strided_slice %6 {offsets = [0, 129], sizes = [8, 256], strides = [1, 1]} : vector<8x512xf32> to vector<8x256xf32>
    %21 = vector.broadcast %8 : vector<1x256xf32> to vector<8x256xf32>
    %22 = arith.mulf %20, %21 : vector<8x256xf32>
    %23 = vector.extract_strided_slice %6 {offsets = [0, 143], sizes = [8, 256], strides = [1, 1]} : vector<8x512xf32> to vector<8x256xf32>
    %24 = vector.broadcast %7 : vector<1x256xf32> to vector<8x256xf32>
    %25 = arith.mulf %23, %24 : vector<8x256xf32>
    %26 = vector.extract_strided_slice %6 {offsets = [0, 144], sizes = [8, 256], strides = [1, 1]} : vector<8x512xf32> to vector<8x256xf32>
    %27 = vector.extract_strided_slice %6 {offsets = [0, 145], sizes = [8, 256], strides = [1, 1]} : vector<8x512xf32> to vector<8x256xf32>
    %28 = vector.broadcast %8 : vector<1x256xf32> to vector<8x256xf32>
    %29 = arith.mulf %27, %28 : vector<8x256xf32>
    %30 = tpu.concatenate %11, %12, %15, %18, %19, %22, %25, %26, %29 in 0 : vector<8x256xf32>, vector<8x256xf32>, vector<8x256xf32>, vector<8x256xf32>, vector<8x256xf32>, vector<8x256xf32>, vector<8x256xf32>, vector<8x256xf32>, vector<8x256xf32> -> vector<72x256xf32>
    %cst_8 = arith.constant dense<0.000000e+00> : vector<8x256xf32>
    %31 = tpu.matmul %2, %30, %cst_8 {dimension_numbers = #tpu.dot_dimension_numbers<[1], [0], [0], [1], [0, 0, 1, 1], [], []>} : vector<8x72xf32>, vector<72x256xf32>, vector<8x256xf32> -> vector<8x256xf32>
    %32 = vector.broadcast %3 : vector<8x1xf32> to vector<8x256xf32>
    %33 = arith.addf %31, %32 : vector<8x256xf32>
    %cst_9 = arith.constant 0.000000e+00 : f32
    %34 = vector.broadcast %cst_9 : f32 to vector<8x256xf32>
    %35 = arith.maximumf %33, %34 : vector<8x256xf32>
    %c0_10 = arith.constant 0 : index
    %c0_11 = arith.constant 0 : index
    %36 = vector.load %arg5[%c0_10, %c0_11] : memref<239x64xf32, #tpu.memory_space<vmem>>, vector<239x64xf32>
    %37 = vector.extract_strided_slice %35 {offsets = [0, 0], sizes = [8, 239], strides = [1, 1]} : vector<8x256xf32> to vector<8x239xf32>
    %38 = vector.extract_strided_slice %35 {offsets = [0, 1], sizes = [8, 239], strides = [1, 1]} : vector<8x256xf32> to vector<8x239xf32>
    %39 = arith.maximumf %37, %38 : vector<8x239xf32>
    %40 = vector.extract_strided_slice %35 {offsets = [0, 16], sizes = [8, 239], strides = [1, 1]} : vector<8x256xf32> to vector<8x239xf32>
    %41 = vector.extract_strided_slice %35 {offsets = [0, 17], sizes = [8, 239], strides = [1, 1]} : vector<8x256xf32> to vector<8x239xf32>
    %42 = arith.maximumf %40, %41 : vector<8x239xf32>
    %43 = arith.maximumf %39, %42 : vector<8x239xf32>
    %cst_12 = arith.constant dense<0.000000e+00> : vector<8x64xf32>
    %44 = tpu.matmul %43, %36, %cst_12 {dimension_numbers = #tpu.dot_dimension_numbers<[1], [0], [0], [1], [0, 0, 1, 1], [], []>} : vector<8x239xf32>, vector<239x64xf32>, vector<8x64xf32> -> vector<8x64xf32>
    %c0_13 = arith.constant 0 : index
    %c0_14 = arith.constant 0 : index
    %45 = vector.load %arg6[%c0_13, %c0_14] : memref<16x72xf32, #tpu.memory_space<vmem>>, vector<16x72xf32>
    %c0_15 = arith.constant 0 : index
    %c0_16 = arith.constant 0 : index
    %46 = vector.load %arg7[%c0_15, %c0_16] : memref<16x1xf32, #tpu.memory_space<vmem>>, vector<16x1xf32>
    %c0_17 = arith.constant 0 : index
    %c0_18 = arith.constant 0 : index
    %47 = vector.load %arg8[%c0_17, %c0_18] : memref<2x64xf32, #tpu.memory_space<vmem>>, vector<2x64xf32>
    %cst_19 = arith.constant 0.000000e+00 : f32
    %48 = vector.broadcast %cst_19 : f32 to vector<8x128xf32>
    %49 = tpu.concatenate %48, %44, %48 in 1 : vector<8x128xf32>, vector<8x64xf32>, vector<8x128xf32> -> vector<8x320xf32>
    %50 = vector.extract_strided_slice %47 {offsets = [0, 0], sizes = [1, 64], strides = [1, 1]} : vector<2x64xf32> to vector<1x64xf32>
    %51 = vector.extract_strided_slice %47 {offsets = [1, 0], sizes = [1, 64], strides = [1, 1]} : vector<2x64xf32> to vector<1x64xf32>
    %52 = vector.extract_strided_slice %49 {offsets = [0, 119], sizes = [8, 64], strides = [1, 1]} : vector<8x320xf32> to vector<8x64xf32>
    %53 = vector.broadcast %50 : vector<1x64xf32> to vector<8x64xf32>
    %54 = arith.mulf %52, %53 : vector<8x64xf32>
    %55 = vector.extract_strided_slice %49 {offsets = [0, 120], sizes = [8, 64], strides = [1, 1]} : vector<8x320xf32> to vector<8x64xf32>
    %56 = vector.extract_strided_slice %49 {offsets = [0, 121], sizes = [8, 64], strides = [1, 1]} : vector<8x320xf32> to vector<8x64xf32>
    %57 = vector.broadcast %51 : vector<1x64xf32> to vector<8x64xf32>
    %58 = arith.mulf %56, %57 : vector<8x64xf32>
    %59 = vector.extract_strided_slice %49 {offsets = [0, 127], sizes = [8, 64], strides = [1, 1]} : vector<8x320xf32> to vector<8x64xf32>
    %60 = vector.broadcast %50 : vector<1x64xf32> to vector<8x64xf32>
    %61 = arith.mulf %59, %60 : vector<8x64xf32>
    %62 = vector.extract_strided_slice %49 {offsets = [0, 128], sizes = [8, 64], strides = [1, 1]} : vector<8x320xf32> to vector<8x64xf32>
    %63 = vector.extract_strided_slice %49 {offsets = [0, 129], sizes = [8, 64], strides = [1, 1]} : vector<8x320xf32> to vector<8x64xf32>
    %64 = vector.broadcast %51 : vector<1x64xf32> to vector<8x64xf32>
    %65 = arith.mulf %63, %64 : vector<8x64xf32>
    %66 = vector.extract_strided_slice %49 {offsets = [0, 135], sizes = [8, 64], strides = [1, 1]} : vector<8x320xf32> to vector<8x64xf32>
    %67 = vector.broadcast %50 : vector<1x64xf32> to vector<8x64xf32>
    %68 = arith.mulf %66, %67 : vector<8x64xf32>
    %69 = vector.extract_strided_slice %49 {offsets = [0, 136], sizes = [8, 64], strides = [1, 1]} : vector<8x320xf32> to vector<8x64xf32>
    %70 = vector.extract_strided_slice %49 {offsets = [0, 137], sizes = [8, 64], strides = [1, 1]} : vector<8x320xf32> to vector<8x64xf32>
    %71 = vector.broadcast %51 : vector<1x64xf32> to vector<8x64xf32>
    %72 = arith.mulf %70, %71 : vector<8x64xf32>
    %73 = tpu.concatenate %54, %55, %58, %61, %62, %65, %68, %69, %72 in 0 : vector<8x64xf32>, vector<8x64xf32>, vector<8x64xf32>, vector<8x64xf32>, vector<8x64xf32>, vector<8x64xf32>, vector<8x64xf32>, vector<8x64xf32>, vector<8x64xf32> -> vector<72x64xf32>
    %cst_20 = arith.constant dense<0.000000e+00> : vector<16x64xf32>
    %74 = tpu.matmul %45, %73, %cst_20 {dimension_numbers = #tpu.dot_dimension_numbers<[1], [0], [0], [1], [0, 0, 1, 1], [], []>} : vector<16x72xf32>, vector<72x64xf32>, vector<16x64xf32> -> vector<16x64xf32>
    %75 = vector.broadcast %46 : vector<16x1xf32> to vector<16x64xf32>
    %76 = arith.addf %74, %75 : vector<16x64xf32>
    %cst_21 = arith.constant 0.000000e+00 : f32
    %77 = vector.broadcast %cst_21 : f32 to vector<16x64xf32>
    %78 = arith.maximumf %76, %77 : vector<16x64xf32>
    %c0_22 = arith.constant 0 : index
    %c0_23 = arith.constant 0 : index
    %79 = vector.load %arg9[%c0_22, %c0_23] : memref<55x16xf32, #tpu.memory_space<vmem>>, vector<55x16xf32>
    %80 = vector.extract_strided_slice %78 {offsets = [0, 0], sizes = [16, 55], strides = [1, 1]} : vector<16x64xf32> to vector<16x55xf32>
    %81 = vector.extract_strided_slice %78 {offsets = [0, 1], sizes = [16, 55], strides = [1, 1]} : vector<16x64xf32> to vector<16x55xf32>
    %82 = arith.maximumf %80, %81 : vector<16x55xf32>
    %83 = vector.extract_strided_slice %78 {offsets = [0, 8], sizes = [16, 55], strides = [1, 1]} : vector<16x64xf32> to vector<16x55xf32>
    %84 = vector.extract_strided_slice %78 {offsets = [0, 9], sizes = [16, 55], strides = [1, 1]} : vector<16x64xf32> to vector<16x55xf32>
    %85 = arith.maximumf %83, %84 : vector<16x55xf32>
    %86 = arith.maximumf %82, %85 : vector<16x55xf32>
    %cst_24 = arith.constant dense<0.000000e+00> : vector<16x16xf32>
    %87 = tpu.matmul %86, %79, %cst_24 {dimension_numbers = #tpu.dot_dimension_numbers<[1], [0], [0], [1], [0, 0, 1, 1], [], []>} : vector<16x55xf32>, vector<55x16xf32>, vector<16x16xf32> -> vector<16x16xf32>
    %c0_25 = arith.constant 0 : index
    %c0_26 = arith.constant 0 : index
    %88 = vector.load %arg10[%c0_25, %c0_26] : memref<32x144xf32, #tpu.memory_space<vmem>>, vector<32x144xf32>
    %c0_27 = arith.constant 0 : index
    %c0_28 = arith.constant 0 : index
    %89 = vector.load %arg11[%c0_27, %c0_28] : memref<32x1xf32, #tpu.memory_space<vmem>>, vector<32x1xf32>
    %c0_29 = arith.constant 0 : index
    %c0_30 = arith.constant 0 : index
    %90 = vector.load %arg12[%c0_29, %c0_30] : memref<2x16xf32, #tpu.memory_space<vmem>>, vector<2x16xf32>
    %cst_31 = arith.constant 0.000000e+00 : f32
    %91 = vector.broadcast %cst_31 : f32 to vector<16x128xf32>
    %92 = tpu.concatenate %91, %87, %91 in 1 : vector<16x128xf32>, vector<16x16xf32>, vector<16x128xf32> -> vector<16x272xf32>
    %93 = vector.extract_strided_slice %90 {offsets = [0, 0], sizes = [1, 16], strides = [1, 1]} : vector<2x16xf32> to vector<1x16xf32>
    %94 = vector.extract_strided_slice %90 {offsets = [1, 0], sizes = [1, 16], strides = [1, 1]} : vector<2x16xf32> to vector<1x16xf32>
    %95 = vector.extract_strided_slice %92 {offsets = [0, 123], sizes = [16, 16], strides = [1, 1]} : vector<16x272xf32> to vector<16x16xf32>
    %96 = vector.broadcast %93 : vector<1x16xf32> to vector<16x16xf32>
    %97 = arith.mulf %95, %96 : vector<16x16xf32>
    %98 = vector.extract_strided_slice %92 {offsets = [0, 124], sizes = [16, 16], strides = [1, 1]} : vector<16x272xf32> to vector<16x16xf32>
    %99 = vector.extract_strided_slice %92 {offsets = [0, 125], sizes = [16, 16], strides = [1, 1]} : vector<16x272xf32> to vector<16x16xf32>
    %100 = vector.broadcast %94 : vector<1x16xf32> to vector<16x16xf32>
    %101 = arith.mulf %99, %100 : vector<16x16xf32>
    %102 = vector.extract_strided_slice %92 {offsets = [0, 127], sizes = [16, 16], strides = [1, 1]} : vector<16x272xf32> to vector<16x16xf32>
    %103 = vector.broadcast %93 : vector<1x16xf32> to vector<16x16xf32>
    %104 = arith.mulf %102, %103 : vector<16x16xf32>
    %105 = vector.extract_strided_slice %92 {offsets = [0, 128], sizes = [16, 16], strides = [1, 1]} : vector<16x272xf32> to vector<16x16xf32>
    %106 = vector.extract_strided_slice %92 {offsets = [0, 129], sizes = [16, 16], strides = [1, 1]} : vector<16x272xf32> to vector<16x16xf32>
    %107 = vector.broadcast %94 : vector<1x16xf32> to vector<16x16xf32>
    %108 = arith.mulf %106, %107 : vector<16x16xf32>
    %109 = vector.extract_strided_slice %92 {offsets = [0, 131], sizes = [16, 16], strides = [1, 1]} : vector<16x272xf32> to vector<16x16xf32>
    %110 = vector.broadcast %93 : vector<1x16xf32> to vector<16x16xf32>
    %111 = arith.mulf %109, %110 : vector<16x16xf32>
    %112 = vector.extract_strided_slice %92 {offsets = [0, 132], sizes = [16, 16], strides = [1, 1]} : vector<16x272xf32> to vector<16x16xf32>
    %113 = vector.extract_strided_slice %92 {offsets = [0, 133], sizes = [16, 16], strides = [1, 1]} : vector<16x272xf32> to vector<16x16xf32>
    %114 = vector.broadcast %94 : vector<1x16xf32> to vector<16x16xf32>
    %115 = arith.mulf %113, %114 : vector<16x16xf32>
    %116 = tpu.concatenate %97, %98, %101, %104, %105, %108, %111, %112, %115 in 0 : vector<16x16xf32>, vector<16x16xf32>, vector<16x16xf32>, vector<16x16xf32>, vector<16x16xf32>, vector<16x16xf32>, vector<16x16xf32>, vector<16x16xf32>, vector<16x16xf32> -> vector<144x16xf32>
    %cst_32 = arith.constant dense<0.000000e+00> : vector<32x16xf32>
    %117 = tpu.matmul %88, %116, %cst_32 {dimension_numbers = #tpu.dot_dimension_numbers<[1], [0], [0], [1], [0, 0, 1, 1], [], []>} : vector<32x144xf32>, vector<144x16xf32>, vector<32x16xf32> -> vector<32x16xf32>
    %118 = vector.broadcast %89 : vector<32x1xf32> to vector<32x16xf32>
    %119 = arith.addf %117, %118 : vector<32x16xf32>
    %cst_33 = arith.constant 0.000000e+00 : f32
    %120 = vector.broadcast %cst_33 : f32 to vector<32x16xf32>
    %121 = arith.maximumf %119, %120 : vector<32x16xf32>
    %c0_34 = arith.constant 0 : index
    %c0_35 = arith.constant 0 : index
    %122 = vector.load %arg13[%c0_34, %c0_35] : memref<32x288xf32, #tpu.memory_space<vmem>>, vector<32x288xf32>
    %c0_36 = arith.constant 0 : index
    %c0_37 = arith.constant 0 : index
    %123 = vector.load %arg14[%c0_36, %c0_37] : memref<32x1xf32, #tpu.memory_space<vmem>>, vector<32x1xf32>
    %c0_38 = arith.constant 0 : index
    %c0_39 = arith.constant 0 : index
    %124 = vector.load %arg15[%c0_38, %c0_39] : memref<2x16xf32, #tpu.memory_space<vmem>>, vector<2x16xf32>
    %cst_40 = arith.constant 0.000000e+00 : f32
    %125 = vector.broadcast %cst_40 : f32 to vector<32x128xf32>
    %126 = tpu.concatenate %125, %121, %125 in 1 : vector<32x128xf32>, vector<32x16xf32>, vector<32x128xf32> -> vector<32x272xf32>
    %127 = vector.extract_strided_slice %124 {offsets = [0, 0], sizes = [1, 16], strides = [1, 1]} : vector<2x16xf32> to vector<1x16xf32>
    %128 = vector.extract_strided_slice %124 {offsets = [1, 0], sizes = [1, 16], strides = [1, 1]} : vector<2x16xf32> to vector<1x16xf32>
    %129 = vector.extract_strided_slice %126 {offsets = [0, 123], sizes = [32, 16], strides = [1, 1]} : vector<32x272xf32> to vector<32x16xf32>
    %130 = vector.broadcast %127 : vector<1x16xf32> to vector<32x16xf32>
    %131 = arith.mulf %129, %130 : vector<32x16xf32>
    %132 = vector.extract_strided_slice %126 {offsets = [0, 124], sizes = [32, 16], strides = [1, 1]} : vector<32x272xf32> to vector<32x16xf32>
    %133 = vector.extract_strided_slice %126 {offsets = [0, 125], sizes = [32, 16], strides = [1, 1]} : vector<32x272xf32> to vector<32x16xf32>
    %134 = vector.broadcast %128 : vector<1x16xf32> to vector<32x16xf32>
    %135 = arith.mulf %133, %134 : vector<32x16xf32>
    %136 = vector.extract_strided_slice %126 {offsets = [0, 127], sizes = [32, 16], strides = [1, 1]} : vector<32x272xf32> to vector<32x16xf32>
    %137 = vector.broadcast %127 : vector<1x16xf32> to vector<32x16xf32>
    %138 = arith.mulf %136, %137 : vector<32x16xf32>
    %139 = vector.extract_strided_slice %126 {offsets = [0, 128], sizes = [32, 16], strides = [1, 1]} : vector<32x272xf32> to vector<32x16xf32>
    %140 = vector.extract_strided_slice %126 {offsets = [0, 129], sizes = [32, 16], strides = [1, 1]} : vector<32x272xf32> to vector<32x16xf32>
    %141 = vector.broadcast %128 : vector<1x16xf32> to vector<32x16xf32>
    %142 = arith.mulf %140, %141 : vector<32x16xf32>
    %143 = vector.extract_strided_slice %126 {offsets = [0, 131], sizes = [32, 16], strides = [1, 1]} : vector<32x272xf32> to vector<32x16xf32>
    %144 = vector.broadcast %127 : vector<1x16xf32> to vector<32x16xf32>
    %145 = arith.mulf %143, %144 : vector<32x16xf32>
    %146 = vector.extract_strided_slice %126 {offsets = [0, 132], sizes = [32, 16], strides = [1, 1]} : vector<32x272xf32> to vector<32x16xf32>
    %147 = vector.extract_strided_slice %126 {offsets = [0, 133], sizes = [32, 16], strides = [1, 1]} : vector<32x272xf32> to vector<32x16xf32>
    %148 = vector.broadcast %128 : vector<1x16xf32> to vector<32x16xf32>
    %149 = arith.mulf %147, %148 : vector<32x16xf32>
    %150 = tpu.concatenate %131, %132, %135, %138, %139, %142, %145, %146, %149 in 0 : vector<32x16xf32>, vector<32x16xf32>, vector<32x16xf32>, vector<32x16xf32>, vector<32x16xf32>, vector<32x16xf32>, vector<32x16xf32>, vector<32x16xf32>, vector<32x16xf32> -> vector<288x16xf32>
    %cst_41 = arith.constant dense<0.000000e+00> : vector<32x16xf32>
    %151 = tpu.matmul %122, %150, %cst_41 {dimension_numbers = #tpu.dot_dimension_numbers<[1], [0], [0], [1], [0, 0, 1, 1], [], []>} : vector<32x288xf32>, vector<288x16xf32>, vector<32x16xf32> -> vector<32x16xf32>
    %152 = vector.broadcast %123 : vector<32x1xf32> to vector<32x16xf32>
    %153 = arith.addf %151, %152 : vector<32x16xf32>
    %cst_42 = arith.constant 0.000000e+00 : f32
    %154 = vector.broadcast %cst_42 : f32 to vector<32x16xf32>
    %155 = arith.maximumf %153, %154 : vector<32x16xf32>
    %c0_43 = arith.constant 0 : index
    %c0_44 = arith.constant 0 : index
    %156 = vector.load %arg16[%c0_43, %c0_44] : memref<11x4xf32, #tpu.memory_space<vmem>>, vector<11x4xf32>
    %157 = vector.extract_strided_slice %155 {offsets = [0, 0], sizes = [32, 11], strides = [1, 1]} : vector<32x16xf32> to vector<32x11xf32>
    %158 = vector.extract_strided_slice %155 {offsets = [0, 1], sizes = [32, 11], strides = [1, 1]} : vector<32x16xf32> to vector<32x11xf32>
    %159 = arith.maximumf %157, %158 : vector<32x11xf32>
    %160 = vector.extract_strided_slice %155 {offsets = [0, 4], sizes = [32, 11], strides = [1, 1]} : vector<32x16xf32> to vector<32x11xf32>
    %161 = vector.extract_strided_slice %155 {offsets = [0, 5], sizes = [32, 11], strides = [1, 1]} : vector<32x16xf32> to vector<32x11xf32>
    %162 = arith.maximumf %160, %161 : vector<32x11xf32>
    %163 = arith.maximumf %159, %162 : vector<32x11xf32>
    %cst_45 = arith.constant dense<0.000000e+00> : vector<32x4xf32>
    %164 = tpu.matmul %163, %156, %cst_45 {dimension_numbers = #tpu.dot_dimension_numbers<[1], [0], [0], [1], [0, 0, 1, 1], [], []>} : vector<32x11xf32>, vector<11x4xf32>, vector<32x4xf32> -> vector<32x4xf32>
    %c0_46 = arith.constant 0 : index
    %c0_47 = arith.constant 0 : index
    %c0_48 = arith.constant 0 : index
    %165 = vector.load %arg17[%c0_46, %c0_47, %c0_48] : memref<1x32x4xf32, #tpu.memory_space<vmem>>, vector<1x32x4xf32>
    %166 = vector.shape_cast %165 : vector<1x32x4xf32> to vector<32x4xf32>
    %167 = vector.shape_cast %164 : vector<32x4xf32> to vector<1x32x4xf32>
    tpu.vector_store %arg17[%c0_46, %c0_47, %c0_48], %167 {strides = array<i32>} : memref<1x32x4xf32, #tpu.memory_space<vmem>>, vector<1x32x4xf32>,
    return
  }
  func.func @transform_0(%arg0: i32) -> (i32, i32, i32) {
    %c0_i32 = arith.constant 0 : i32
    %c0_i32_0 = arith.constant 0 : i32
    %c0_i32_1 = arith.constant 0 : i32
    return %arg0, %c0_i32, %c0_i32_0 : i32, i32, i32
  }
  func.func @transform_1(%arg0: i32) -> (i32, i32) {
    %c0_i32 = arith.constant 0 : i32
    %c0_i32_0 = arith.constant 0 : i32
    %c0_i32_1 = arith.constant 0 : i32
    return %c0_i32, %c0_i32_0 : i32, i32
  }
  func.func @transform_2(%arg0: i32) -> (i32, i32) {
    %c0_i32 = arith.constant 0 : i32
    %c0_i32_0 = arith.constant 0 : i32
    %c0_i32_1 = arith.constant 0 : i32
    return %c0_i32, %c0_i32_0 : i32, i32
  }
  func.func @transform_3(%arg0: i32) -> (i32, i32) {
    %c0_i32 = arith.constant 0 : i32
    %c0_i32_0 = arith.constant 0 : i32
    %c0_i32_1 = arith.constant 0 : i32
    return %c0_i32, %c0_i32_0 : i32, i32
  }
  func.func @transform_4(%arg0: i32) -> (i32, i32) {
    %c0_i32 = arith.constant 0 : i32
    %c0_i32_0 = arith.constant 0 : i32
    %c0_i32_1 = arith.constant 0 : i32
    return %c0_i32, %c0_i32_0 : i32, i32
  }
  func.func @transform_5(%arg0: i32) -> (i32, i32) {
    %c0_i32 = arith.constant 0 : i32
    %c0_i32_0 = arith.constant 0 : i32
    %c0_i32_1 = arith.constant 0 : i32
    return %c0_i32, %c0_i32_0 : i32, i32
  }
  func.func @transform_6(%arg0: i32) -> (i32, i32) {
    %c0_i32 = arith.constant 0 : i32
    %c0_i32_0 = arith.constant 0 : i32
    %c0_i32_1 = arith.constant 0 : i32
    return %c0_i32, %c0_i32_0 : i32, i32
  }
  func.func @transform_7(%arg0: i32) -> (i32, i32) {
    %c0_i32 = arith.constant 0 : i32
    %c0_i32_0 = arith.constant 0 : i32
    %c0_i32_1 = arith.constant 0 : i32
    return %c0_i32, %c0_i32_0 : i32, i32
  }
  func.func @transform_8(%arg0: i32) -> (i32, i32) {
    %c0_i32 = arith.constant 0 : i32
    %c0_i32_0 = arith.constant 0 : i32
    %c0_i32_1 = arith.constant 0 : i32
    return %c0_i32, %c0_i32_0 : i32, i32
  }
  func.func @transform_9(%arg0: i32) -> (i32, i32) {
    %c0_i32 = arith.constant 0 : i32
    %c0_i32_0 = arith.constant 0 : i32
    %c0_i32_1 = arith.constant 0 : i32
    return %c0_i32, %c0_i32_0 : i32, i32
  }
  func.func @transform_10(%arg0: i32) -> (i32, i32) {
    %c0_i32 = arith.constant 0 : i32
    %c0_i32_0 = arith.constant 0 : i32
    %c0_i32_1 = arith.constant 0 : i32
    return %c0_i32, %c0_i32_0 : i32, i32
  }
  func.func @transform_11(%arg0: i32) -> (i32, i32) {
    %c0_i32 = arith.constant 0 : i32
    %c0_i32_0 = arith.constant 0 : i32
    %c0_i32_1 = arith.constant 0 : i32
    return %c0_i32, %c0_i32_0 : i32, i32
  }
  func.func @transform_12(%arg0: i32) -> (i32, i32) {
    %c0_i32 = arith.constant 0 : i32
    %c0_i32_0 = arith.constant 0 : i32
    %c0_i32_1 = arith.constant 0 : i32
    return %c0_i32, %c0_i32_0 : i32, i32
  }
  func.func @transform_13(%arg0: i32) -> (i32, i32) {
    %c0_i32 = arith.constant 0 : i32
    %c0_i32_0 = arith.constant 0 : i32
    %c0_i32_1 = arith.constant 0 : i32
    return %c0_i32, %c0_i32_0 : i32, i32
  }
  func.func @transform_14(%arg0: i32) -> (i32, i32) {
    %c0_i32 = arith.constant 0 : i32
    %c0_i32_0 = arith.constant 0 : i32
    %c0_i32_1 = arith.constant 0 : i32
    return %c0_i32, %c0_i32_0 : i32, i32
  }
  func.func @transform_15(%arg0: i32) -> (i32, i32) {
    %c0_i32 = arith.constant 0 : i32
    %c0_i32_0 = arith.constant 0 : i32
    %c0_i32_1 = arith.constant 0 : i32
    return %c0_i32, %c0_i32_0 : i32, i32
  }
  func.func @transform_16(%arg0: i32) -> (i32, i32, i32) {
    %c0_i32 = arith.constant 0 : i32
    %c0_i32_0 = arith.constant 0 : i32
    %c0_i32_1 = arith.constant 0 : i32
    return %arg0, %c0_i32, %c0_i32_0 : i32, i32, i32
  }
}

</mosaic_0001>

<llo_original>
// kernel: my_vgg_forward.1
$region0: #{my_vgg_forward.1}
  #allocation0 [shape = 'u32[]', space=smem, size = 0x4, offset = 0x4, fixed_abs, tag = 'smem constant byte address 0x4 - core index']
  #allocation1 [shape = 'u32[144,128]{1,0:T(1,128)}', space=vmem, size = 0x12000, scoped, tag = 'internal scratch']
  %s0 = inlined_call_operand.vmem [shape: f32[2,8,256], index: 0, kind: input, shape index: {}]
  %s1 = inlined_call_operand.vmem [shape: f32[8,72], index: 1, kind: input, shape index: {}]
  %s2 = inlined_call_operand.vmem [shape: f32[8,1], index: 2, kind: input, shape index: {}]
  %s3 = inlined_call_operand.vmem [shape: f32[2,256], index: 3, kind: input, shape index: {}]
  %s4 = inlined_call_operand.vmem [shape: f32[239,64], index: 4, kind: input, shape index: {}]
  %s5 = inlined_call_operand.vmem [shape: f32[16,72], index: 5, kind: input, shape index: {}]
  %s6 = inlined_call_operand.vmem [shape: f32[16,1], index: 6, kind: input, shape index: {}]
  %s7 = inlined_call_operand.vmem [shape: f32[2,64], index: 7, kind: input, shape index: {}]
  %s8 = inlined_call_operand.vmem [shape: f32[55,16], index: 8, kind: input, shape index: {}]
  %s9 = inlined_call_operand.vmem [shape: f32[32,144], index: 9, kind: input, shape index: {}]
  %s10 = inlined_call_operand.vmem [shape: f32[32,1], index: 10, kind: input, shape index: {}]
  %s11 = inlined_call_operand.vmem [shape: f32[2,16], index: 11, kind: input, shape index: {}, may-alias: {11,14}]
  %s12 = inlined_call_operand.vmem [shape: f32[32,288], index: 12, kind: input, shape index: {}]
  %s13 = inlined_call_operand.vmem [shape: f32[32,1], index: 13, kind: input, shape index: {}]
  %s14 = inlined_call_operand.vmem [shape: f32[2,16], index: 14, kind: input, shape index: {}, may-alias: {11,14}]
  %s15 = inlined_call_operand.vmem [shape: f32[11,4], index: 15, kind: input, shape index: {}]
  %s16 = inlined_call_operand.vmem [shape: f32[2,32,4], index: 16, kind: output, shape index: {}]
  %s17 = sld [smem:[#allocation0]]
  $region97: #{my_vgg_forward.1} parent=0
    _
  %s19 = ssub.s32 1, %s17
  %s20 = scalar_select 0, %s19, %s17
  loop: start=0, step=1, limit=4
  $region2: #{my_vgg_forward.1} parent=0 // loop_pre_header
    _
  $region3: #{my_vgg_forward.1} parent=0 // loop_header
    %s22 = sphi 0, %s26
    %p23 = scmp.ge.s32.totalorder %s22, 4
    %s32 = sphi 0, %s34
    %s35 = sphi 0, %s32
    %s36 = sphi 0, %s35
    %s52 = sphi 0, %s36
    %s56 = sphi 0, %s56
    %s58 = sphi 0, %s56
    %s59 = sphi 0, %s58
    %s73 = sphi 0, %s59
    %s77 = sphi 0, %s77
    %s79 = sphi 0, %s77
    %s80 = sphi 0, %s79
    %s94 = sphi 0, %s80
    %s98 = sphi 0, %s98
    %s100 = sphi 0, %s98
    %s101 = sphi 0, %s100
    %s115 = sphi 0, %s101
    %s119 = sphi 0, %s119
    %s121 = sphi 0, %s119
    %s122 = sphi 0, %s121
    %s136 = sphi 0, %s122
    %s140 = sphi 0, %s140
    %s142 = sphi 0, %s140
    %s143 = sphi 0, %s142
    %s157 = sphi 0, %s143
    %s161 = sphi 0, %s161
    %s163 = sphi 0, %s161
    %s164 = sphi 0, %s163
    %s178 = sphi 0, %s164
    %s182 = sphi 0, %s182
    %s184 = sphi 0, %s182
    %s185 = sphi 0, %s184
    %s199 = sphi 0, %s185
    %s203 = sphi 0, %s203
    %s205 = sphi 0, %s203
    %s206 = sphi 0, %s205
    %s220 = sphi 0, %s206
    %s224 = sphi 0, %s224
    %s226 = sphi 0, %s224
    %s227 = sphi 0, %s226
    %s241 = sphi 0, %s227
    %s245 = sphi 0, %s245
    %s247 = sphi 0, %s245
    %s248 = sphi 0, %s247
    %s262 = sphi 0, %s248
    %s266 = sphi 0, %s266
    %s268 = sphi 0, %s266
    %s269 = sphi 0, %s268
    %s283 = sphi 0, %s269
    %s287 = sphi 0, %s287
    %s289 = sphi 0, %s287
    %s290 = sphi 0, %s289
    %s304 = sphi 0, %s290
    %s308 = sphi 0, %s308
    %s310 = sphi 0, %s308
    %s311 = sphi 0, %s310
    %s325 = sphi 0, %s311
    %s329 = sphi 0, %s329
    %s331 = sphi 0, %s329
    %s332 = sphi 0, %s331
    %s346 = sphi 0, %s332
    %s350 = sphi 0, %s350
    %s352 = sphi 0, %s350
    %s353 = sphi 0, %s352
    %s367 = sphi 0, %s353
    %s373 = sphi 0, %s375
    %s376 = sphi 0, %s373
    %s377 = sphi 0, %s376
    %s393 = sphi 0, %s377
  $region4: #{my_vgg_forward.1} parent=0 // loop_header_branch
    %25 = sbr.rel (%p23) target = $region8
  $region5: #{my_vgg_forward.1} parent=0 // loop_body
    %s27 = ssub.s32 %s22, 1
    %s28 = ssub.s32 %s22, 2
    %s29 = sadd.s32 %s22, 1
    %s30 = ssub.s32 %s22, %s29
    %p31 = scmp.eq.s32.totalorder %s30, 0
    %s33 = sadd.s32 %s32, 1
    %s34 = scalar_select %p31, %s32, %s33
    %p37 = pneg %p31
    %p38 = scmp.eq.s32.totalorder %s22, 1
    %p39 = por %p37, %p38
    %p40 = scmp.ne.s32.totalorder %s32, %s35
    %p41 = scmp.eq.s32.totalorder %s22, 0
    %p42 = por %p40, %p41
    %p43 = scmp.ne.s32.totalorder %s32, %s35
    %p44 = scmp.eq.s32.totalorder %s27, 1
    %p45 = por %p43, %p44
    %p46 = scmp.ne.s32.totalorder %s35, %s36
    %p47 = scmp.eq.s32.totalorder %s27, 0
    %p48 = por %p46, %p47
    %p49 = scmp.ne.s32.totalorder %s35, %s36
    %p50 = scmp.eq.s32.totalorder %s28, 1
    %p51 = por %p49, %p50
    %p53 = scmp.ne.s32.totalorder %s36, %s52
    %p54 = scmp.eq.s32.totalorder %s28, 0
    %p55 = por %p53, %p54
    %s57 = sadd.s32 %s56, 1
    %p60 = scmp.eq.s32.totalorder %s22, 1
    %p61 = scmp.ne.s32.totalorder %s56, %s58
    %p62 = scmp.eq.s32.totalorder %s22, 0
    %p63 = por %p61, %p62
    %p64 = scmp.ne.s32.totalorder %s56, %s58
    %p65 = scmp.eq.s32.totalorder %s27, 1
    %p66 = por %p64, %p65
    %p67 = scmp.ne.s32.totalorder %s58, %s59
    %p68 = scmp.eq.s32.totalorder %s27, 0
    %p69 = por %p67, %p68
    %p70 = scmp.ne.s32.totalorder %s58, %s59
    %p71 = scmp.eq.s32.totalorder %s28, 1
    %p72 = por %p70, %p71
    %p74 = scmp.ne.s32.totalorder %s59, %s73
    %p75 = scmp.eq.s32.totalorder %s28, 0
    %p76 = por %p74, %p75
    %s78 = sadd.s32 %s77, 1
    %p81 = scmp.eq.s32.totalorder %s22, 1
    %p82 = scmp.ne.s32.totalorder %s77, %s79
    %p83 = scmp.eq.s32.totalorder %s22, 0
    %p84 = por %p82, %p83
    %p85 = scmp.ne.s32.totalorder %s77, %s79
    %p86 = scmp.eq.s32.totalorder %s27, 1
    %p87 = por %p85, %p86
    %p88 = scmp.ne.s32.totalorder %s79, %s80
    %p89 = scmp.eq.s32.totalorder %s27, 0
    %p90 = por %p88, %p89
    %p91 = scmp.ne.s32.totalorder %s79, %s80
    %p92 = scmp.eq.s32.totalorder %s28, 1
    %p93 = por %p91, %p92
    %p95 = scmp.ne.s32.totalorder %s80, %s94
    %p96 = scmp.eq.s32.totalorder %s28, 0
    %p97 = por %p95, %p96
    %s99 = sadd.s32 %s98, 1
    %p102 = scmp.eq.s32.totalorder %s22, 1
    %p103 = scmp.ne.s32.totalorder %s98, %s100
    %p104 = scmp.eq.s32.totalorder %s22, 0
    %p105 = por %p103, %p104
    %p106 = scmp.ne.s32.totalorder %s98, %s100
    %p107 = scmp.eq.s32.totalorder %s27, 1
    %p108 = por %p106, %p107
    %p109 = scmp.ne.s32.totalorder %s100, %s101
    %p110 = scmp.eq.s32.totalorder %s27, 0
    %p111 = por %p109, %p110
    %p112 = scmp.ne.s32.totalorder %s100, %s101
    %p113 = scmp.eq.s32.totalorder %s28, 1
    %p114 = por %p112, %p113
    %p116 = scmp.ne.s32.totalorder %s101, %s115
    %p117 = scmp.eq.s32.totalorder %s28, 0
    %p118 = por %p116, %p117
    %s120 = sadd.s32 %s119, 1
    %p123 = scmp.eq.s32.totalorder %s22, 1
    %p124 = scmp.ne.s32.totalorder %s119, %s121
    %p125 = scmp.eq.s32.totalorder %s22, 0
    %p126 = por %p124, %p125
    %p127 = scmp.ne.s32.totalorder %s119, %s121
    %p128 = scmp.eq.s32.totalorder %s27, 1
    %p129 = por %p127, %p128
    %p130 = scmp.ne.s32.totalorder %s121, %s122
    %p131 = scmp.eq.s32.totalorder %s27, 0
    %p132 = por %p130, %p131
    %p133 = scmp.ne.s32.totalorder %s121, %s122
    %p134 = scmp.eq.s32.totalorder %s28, 1
    %p135 = por %p133, %p134
    %p137 = scmp.ne.s32.totalorder %s122, %s136
    %p138 = scmp.eq.s32.totalorder %s28, 0
    %p139 = por %p137, %p138
    %s141 = sadd.s32 %s140, 1
    %p144 = scmp.eq.s32.totalorder %s22, 1
    %p145 = scmp.ne.s32.totalorder %s140, %s142
    %p146 = scmp.eq.s32.totalorder %s22, 0
    %p147 = por %p145, %p146
    %p148 = scmp.ne.s32.totalorder %s140, %s142
    %p149 = scmp.eq.s32.totalorder %s27, 1
    %p150 = por %p148, %p149
    %p151 = scmp.ne.s32.totalorder %s142, %s143
    %p152 = scmp.eq.s32.totalorder %s27, 0
    %p153 = por %p151, %p152
    %p154 = scmp.ne.s32.totalorder %s142, %s143
    %p155 = scmp.eq.s32.totalorder %s28, 1
    %p156 = por %p154, %p155
    %p158 = scmp.ne.s32.totalorder %s143, %s157
    %p159 = scmp.eq.s32.totalorder %s28, 0
    %p160 = por %p158, %p159
    %s162 = sadd.s32 %s161, 1
    %p165 = scmp.eq.s32.totalorder %s22, 1
    %p166 = scmp.ne.s32.totalorder %s161, %s163
    %p167 = scmp.eq.s32.totalorder %s22, 0
    %p168 = por %p166, %p167
    %p169 = scmp.ne.s32.totalorder %s161, %s163
    %p170 = scmp.eq.s32.totalorder %s27, 1
    %p171 = por %p169, %p170
    %p172 = scmp.ne.s32.totalorder %s163, %s164
    %p173 = scmp.eq.s32.totalorder %s27, 0
    %p174 = por %p172, %p173
    %p175 = scmp.ne.s32.totalorder %s163, %s164
    %p176 = scmp.eq.s32.totalorder %s28, 1
    %p177 = por %p175, %p176
    %p179 = scmp.ne.s32.totalorder %s164, %s178
    %p180 = scmp.eq.s32.totalorder %s28, 0
    %p181 = por %p179, %p180
    %s183 = sadd.s32 %s182, 1
    %p186 = scmp.eq.s32.totalorder %s22, 1
    %p187 = scmp.ne.s32.totalorder %s182, %s184
    %p188 = scmp.eq.s32.totalorder %s22, 0
    %p189 = por %p187, %p188
    %p190 = scmp.ne.s32.totalorder %s182, %s184
    %p191 = scmp.eq.s32.totalorder %s27, 1
    %p192 = por %p190, %p191
    %p193 = scmp.ne.s32.totalorder %s184, %s185
    %p194 = scmp.eq.s32.totalorder %s27, 0
    %p195 = por %p193, %p194
    %p196 = scmp.ne.s32.totalorder %s184, %s185
    %p197 = scmp.eq.s32.totalorder %s28, 1
    %p198 = por %p196, %p197
    %p200 = scmp.ne.s32.totalorder %s185, %s199
    %p201 = scmp.eq.s32.totalorder %s28, 0
    %p202 = por %p200, %p201
    %s204 = sadd.s32 %s203, 1
    %p207 = scmp.eq.s32.totalorder %s22, 1
    %p208 = scmp.ne.s32.totalorder %s203, %s205
    %p209 = scmp.eq.s32.totalorder %s22, 0
    %p210 = por %p208, %p209
    %p211 = scmp.ne.s32.totalorder %s203, %s205
    %p212 = scmp.eq.s32.totalorder %s27, 1
    %p213 = por %p211, %p212
    %p214 = scmp.ne.s32.totalorder %s205, %s206
    %p215 = scmp.eq.s32.totalorder %s27, 0
    %p216 = por %p214, %p215
    %p217 = scmp.ne.s32.totalorder %s205, %s206
    %p218 = scmp.eq.s32.totalorder %s28, 1
    %p219 = por %p217, %p218
    %p221 = scmp.ne.s32.totalorder %s206, %s220
    %p222 = scmp.eq.s32.totalorder %s28, 0
    %p223 = por %p221, %p222
    %s225 = sadd.s32 %s224, 1
    %p228 = scmp.eq.s32.totalorder %s22, 1
    %p229 = scmp.ne.s32.totalorder %s224, %s226
    %p230 = scmp.eq.s32.totalorder %s22, 0
    %p231 = por %p229, %p230
    %p232 = scmp.ne.s32.totalorder %s224, %s226
    %p233 = scmp.eq.s32.totalorder %s27, 1
    %p234 = por %p232, %p233
    %p235 = scmp.ne.s32.totalorder %s226, %s227
    %p236 = scmp.eq.s32.totalorder %s27, 0
    %p237 = por %p235, %p236
    %p238 = scmp.ne.s32.totalorder %s226, %s227
    %p239 = scmp.eq.s32.totalorder %s28, 1
    %p240 = por %p238, %p239
    %p242 = scmp.ne.s32.totalorder %s227, %s241
    %p243 = scmp.eq.s32.totalorder %s28, 0
    %p244 = por %p242, %p243
    %s246 = sadd.s32 %s245, 1
    %p249 = scmp.eq.s32.totalorder %s22, 1
    %p250 = scmp.ne.s32.totalorder %s245, %s247
    %p251 = scmp.eq.s32.totalorder %s22, 0
    %p252 = por %p250, %p251
    %p253 = scmp.ne.s32.totalorder %s245, %s247
    %p254 = scmp.eq.s32.totalorder %s27, 1
    %p255 = por %p253, %p254
    %p256 = scmp.ne.s32.totalorder %s247, %s248
    %p257 = scmp.eq.s32.totalorder %s27, 0
    %p258 = por %p256, %p257
    %p259 = scmp.ne.s32.totalorder %s247, %s248
    %p260 = scmp.eq.s32.totalorder %s28, 1
    %p261 = por %p259, %p260
    %p263 = scmp.ne.s32.totalorder %s248, %s262
    %p264 = scmp.eq.s32.totalorder %s28, 0
    %p265 = por %p263, %p264
    %s267 = sadd.s32 %s266, 1
    %p270 = scmp.eq.s32.totalorder %s22, 1
    %p271 = scmp.ne.s32.totalorder %s266, %s268
    %p272 = scmp.eq.s32.totalorder %s22, 0
    %p273 = por %p271, %p272
    %p274 = scmp.ne.s32.totalorder %s266, %s268
    %p275 = scmp.eq.s32.totalorder %s27, 1
    %p276 = por %p274, %p275
    %p277 = scmp.ne.s32.totalorder %s268, %s269
    %p278 = scmp.eq.s32.totalorder %s27, 0
    %p279 = por %p277, %p278
    %p280 = scmp.ne.s32.totalorder %s268, %s269
    %p281 = scmp.eq.s32.totalorder %s28, 1
    %p282 = por %p280, %p281
    %p284 = scmp.ne.s32.totalorder %s269, %s283
    %p285 = scmp.eq.s32.totalorder %s28, 0
    %p286 = por %p284, %p285
    %s288 = sadd.s32 %s287, 1
    %p291 = scmp.eq.s32.totalorder %s22, 1
    %p292 = scmp.ne.s32.totalorder %s287, %s289
    %p293 = scmp.eq.s32.totalorder %s22, 0
    %p294 = por %p292, %p293
    %p295 = scmp.ne.s32.totalorder %s287, %s289
    %p296 = scmp.eq.s32.totalorder %s27, 1
    %p297 = por %p295, %p296
    %p298 = scmp.ne.s32.totalorder %s289, %s290
    %p299 = scmp.eq.s32.totalorder %s27, 0
    %p300 = por %p298, %p299
    %p301 = scmp.ne.s32.totalorder %s289, %s290
    %p302 = scmp.eq.s32.totalorder %s28, 1
    %p303 = por %p301, %p302
    %p305 = scmp.ne.s32.totalorder %s290, %s304
    %p306 = scmp.eq.s32.totalorder %s28, 0
    %p307 = por %p305, %p306
    %s309 = sadd.s32 %s308, 1
    %p312 = scmp.eq.s32.totalorder %s22, 1
    %p313 = scmp.ne.s32.totalorder %s308, %s310
    %p314 = scmp.eq.s32.totalorder %s22, 0
    %p315 = por %p313, %p314
    %p316 = scmp.ne.s32.totalorder %s308, %s310
    %p317 = scmp.eq.s32.totalorder %s27, 1
    %p318 = por %p316, %p317
    %p319 = scmp.ne.s32.totalorder %s310, %s311
    %p320 = scmp.eq.s32.totalorder %s27, 0
    %p321 = por %p319, %p320
    %p322 = scmp.ne.s32.totalorder %s310, %s311
    %p323 = scmp.eq.s32.totalorder %s28, 1
    %p324 = por %p322, %p323
    %p326 = scmp.ne.s32.totalorder %s311, %s325
    %p327 = scmp.eq.s32.totalorder %s28, 0
    %p328 = por %p326, %p327
    %s330 = sadd.s32 %s329, 1
    %p333 = scmp.eq.s32.totalorder %s22, 1
    %p334 = scmp.ne.s32.totalorder %s329, %s331
    %p335 = scmp.eq.s32.totalorder %s22, 0
    %p336 = por %p334, %p335
    %p337 = scmp.ne.s32.totalorder %s329, %s331
    %p338 = scmp.eq.s32.totalorder %s27, 1
    %p339 = por %p337, %p338
    %p340 = scmp.ne.s32.totalorder %s331, %s332
    %p341 = scmp.eq.s32.totalorder %s27, 0
    %p342 = por %p340, %p341
    %p343 = scmp.ne.s32.totalorder %s331, %s332
    %p344 = scmp.eq.s32.totalorder %s28, 1
    %p345 = por %p343, %p344
    %p347 = scmp.ne.s32.totalorder %s332, %s346
    %p348 = scmp.eq.s32.totalorder %s28, 0
    %p349 = por %p347, %p348
    %s351 = sadd.s32 %s350, 1
    %p354 = scmp.eq.s32.totalorder %s22, 1
    %p355 = scmp.ne.s32.totalorder %s350, %s352
    %p356 = scmp.eq.s32.totalorder %s22, 0
    %p357 = por %p355, %p356
    %p358 = scmp.ne.s32.totalorder %s350, %s352
    %p359 = scmp.eq.s32.totalorder %s27, 1
    %p360 = por %p358, %p359
    %p361 = scmp.ne.s32.totalorder %s352, %s353
    %p362 = scmp.eq.s32.totalorder %s27, 0
    %p363 = por %p361, %p362
    %p364 = scmp.ne.s32.totalorder %s352, %s353
    %p365 = scmp.eq.s32.totalorder %s28, 1
    %p366 = por %p364, %p365
    %p368 = scmp.ne.s32.totalorder %s353, %s367
    %p369 = scmp.eq.s32.totalorder %s28, 0
    %p370 = por %p368, %p369
    %s371 = ssub.s32 %s22, %s29
    %p372 = scmp.eq.s32.totalorder %s371, 0
    %s374 = sadd.s32 %s373, 1
    %s375 = scalar_select %p372, %s373, %s374
    %p378 = pneg %p372
    %p379 = scmp.eq.s32.totalorder %s22, 1
    %p380 = por %p378, %p379
    %p381 = scmp.ne.s32.totalorder %s373, %s376
    %p382 = scmp.eq.s32.totalorder %s22, 0
    %p383 = por %p381, %p382
    %p384 = scmp.ne.s32.totalorder %s373, %s376
    %p385 = scmp.eq.s32.totalorder %s27, 1
    %p386 = por %p384, %p385
    %p387 = scmp.ne.s32.totalorder %s376, %s377
    %p388 = scmp.eq.s32.totalorder %s27, 0
    %p389 = por %p387, %p388
    %p390 = scmp.ne.s32.totalorder %s376, %s377
    %p391 = scmp.eq.s32.totalorder %s28, 1
    %p392 = por %p390, %p391
    %p394 = scmp.ne.s32.totalorder %s377, %s393
    %p395 = scmp.eq.s32.totalorder %s28, 0
    %p396 = por %p394, %p395
    %p397 = scmp.le.s32.totalorder 1, %s22
    %p398 = scmp.lt.s32.totalorder %s22, 3
    %p399 = pnand %p397, %p398
    %p400 = pneg %p399
    // Predicated region
    $region9: #{my_vgg_forward.1} parent=5 // pred_check
      _
    $region10: #{my_vgg_forward.1} parent=5 // pred_check_branch
      %402 = sbr.rel (%p399) target = $region12
    $region11: #{my_vgg_forward.1} parent=5 // pred_region
      %s403 = ssub.s32 %s22, 1
      // Predicated region
      $region13: #{my_vgg_forward.1} parent=11 // pred_check
        %p404 = pneg %p69
      $region14: #{my_vgg_forward.1} parent=11 // pred_check_branch
        %406 = sbr.rel (%p404) target = $region16
      $region15: #{my_vgg_forward.1} parent=11 // pred_region
        _
      $region16: #{my_vgg_forward.1} parent=11 // pred_fallthru
        _
      // Predicated region
      $region17: #{my_vgg_forward.1} parent=11 // pred_check
        %p407 = pneg %p90
      $region18: #{my_vgg_forward.1} parent=11 // pred_check_branch
        %409 = sbr.rel (%p407) target = $region20
      $region19: #{my_vgg_forward.1} parent=11 // pred_region
        _
      $region20: #{my_vgg_forward.1} parent=11 // pred_fallthru
        _
      // Predicated region
      $region21: #{my_vgg_forward.1} parent=11 // pred_check
        %p410 = pneg %p111
      $region22: #{my_vgg_forward.1} parent=11 // pred_check_branch
        %412 = sbr.rel (%p410) target = $region24
      $region23: #{my_vgg_forward.1} parent=11 // pred_region
        _
      $region24: #{my_vgg_forward.1} parent=11 // pred_fallthru
        _
      // Predicated region
      $region25: #{my_vgg_forward.1} parent=11 // pred_check
        %p413 = pneg %p132
      $region26: #{my_vgg_forward.1} parent=11 // pred_check_branch
        %415 = sbr.rel (%p413) target = $region28
      $region27: #{my_vgg_forward.1} parent=11 // pred_region
        _
      $region28: #{my_vgg_forward.1} parent=11 // pred_fallthru
        _
      // Predicated region
      $region29: #{my_vgg_forward.1} parent=11 // pred_check
        %p416 = pneg %p153
      $region30: #{my_vgg_forward.1} parent=11 // pred_check_branch
        %418 = sbr.rel (%p416) target = $region32
      $region31: #{my_vgg_forward.1} parent=11 // pred_region
        _
      $region32: #{my_vgg_forward.1} parent=11 // pred_fallthru
        _
      // Predicated region
      $region33: #{my_vgg_forward.1} parent=11 // pred_check
        %p419 = pneg %p174
      $region34: #{my_vgg_forward.1} parent=11 // pred_check_branch
        %421 = sbr.rel (%p419) target = $region36
      $region35: #{my_vgg_forward.1} parent=11 // pred_region
        _
      $region36: #{my_vgg_forward.1} parent=11 // pred_fallthru
        _
      // Predicated region
      $region37: #{my_vgg_forward.1} parent=11 // pred_check
        %p422 = pneg %p195
      $region38: #{my_vgg_forward.1} parent=11 // pred_check_branch
        %424 = sbr.rel (%p422) target = $region40
      $region39: #{my_vgg_forward.1} parent=11 // pred_region
        _
      $region40: #{my_vgg_forward.1} parent=11 // pred_fallthru
        _
      // Predicated region
      $region41: #{my_vgg_forward.1} parent=11 // pred_check
        %p425 = pneg %p216
      $region42: #{my_vgg_forward.1} parent=11 // pred_check_branch
        %427 = sbr.rel (%p425) target = $region44
      $region43: #{my_vgg_forward.1} parent=11 // pred_region
        _
      $region44: #{my_vgg_forward.1} parent=11 // pred_fallthru
        _
      // Predicated region
      $region45: #{my_vgg_forward.1} parent=11 // pred_check
        %p428 = pneg %p237
      $region46: #{my_vgg_forward.1} parent=11 // pred_check_branch
        %430 = sbr.rel (%p428) target = $region48
      $region47: #{my_vgg_forward.1} parent=11 // pred_region
        _
      $region48: #{my_vgg_forward.1} parent=11 // pred_fallthru
        _
      // Predicated region
      $region49: #{my_vgg_forward.1} parent=11 // pred_check
        %p431 = pneg %p258
      $region50: #{my_vgg_forward.1} parent=11 // pred_check_branch
        %433 = sbr.rel (%p431) target = $region52
      $region51: #{my_vgg_forward.1} parent=11 // pred_region
        _
      $region52: #{my_vgg_forward.1} parent=11 // pred_fallthru
        _
      // Predicated region
      $region53: #{my_vgg_forward.1} parent=11 // pred_check
        %p434 = pneg %p279
      $region54: #{my_vgg_forward.1} parent=11 // pred_check_branch
        %436 = sbr.rel (%p434) target = $region56
      $region55: #{my_vgg_forward.1} parent=11 // pred_region
        _
      $region56: #{my_vgg_forward.1} parent=11 // pred_fallthru
        _
      // Predicated region
      $region57: #{my_vgg_forward.1} parent=11 // pred_check
        %p437 = pneg %p300
      $region58: #{my_vgg_forward.1} parent=11 // pred_check_branch
        %439 = sbr.rel (%p437) target = $region60
      $region59: #{my_vgg_forward.1} parent=11 // pred_region
        _
      $region60: #{my_vgg_forward.1} parent=11 // pred_fallthru
        _
      // Predicated region
      $region61: #{my_vgg_forward.1} parent=11 // pred_check
        %p440 = pneg %p321
      $region62: #{my_vgg_forward.1} parent=11 // pred_check_branch
        %442 = sbr.rel (%p440) target = $region64
      $region63: #{my_vgg_forward.1} parent=11 // pred_region
        _
      $region64: #{my_vgg_forward.1} parent=11 // pred_fallthru
        _
      // Predicated region
      $region65: #{my_vgg_forward.1} parent=11 // pred_check
        %p443 = pneg %p342
      $region66: #{my_vgg_forward.1} parent=11 // pred_check_branch
        %445 = sbr.rel (%p443) target = $region68
      $region67: #{my_vgg_forward.1} parent=11 // pred_region
        _
      $region68: #{my_vgg_forward.1} parent=11 // pred_fallthru
        _
      // Predicated region
      $region69: #{my_vgg_forward.1} parent=11 // pred_check
        %p446 = pneg %p363
      $region70: #{my_vgg_forward.1} parent=11 // pred_check_branch
        %448 = sbr.rel (%p446) target = $region72
      $region71: #{my_vgg_forward.1} parent=11 // pred_region
        _
      $region72: #{my_vgg_forward.1} parent=11 // pred_fallthru
        _
    $region12: #{my_vgg_forward.1} parent=5 // pred_fallthru
      _
    %p449 = scmp.lt.s32.totalorder %s22, 2
    // Predicated region
    $region73: #{my_vgg_forward.1} parent=5 // pred_check
      %p450 = pneg %p449
    $region74: #{my_vgg_forward.1} parent=5 // pred_check_branch
      %452 = sbr.rel (%p450) target = $region76
    $region75: #{my_vgg_forward.1} parent=5 // pred_region
      // Predicated region
      $region77: #{my_vgg_forward.1} parent=75 // pred_check
        %p453 = pneg %p42
      $region78: #{my_vgg_forward.1} parent=75 // pred_check_branch
        %455 = sbr.rel (%p453) target = $region80
      $region79: #{my_vgg_forward.1} parent=75 // pred_region
        %p456 = scmp.lt.s32.totalorder %s22, 1
        %s457 = scalar_select %p456, %s22, 1
        %s458 = smul.addr %s457, 2
        %s459 = smul.addr %s458, 8
        %s460 = scalar_lea.vmem %s0, %s459
      $region80: #{my_vgg_forward.1} parent=75 // pred_fallthru
        _
    $region76: #{my_vgg_forward.1} parent=5 // pred_fallthru
      _
    %p461 = scmp.le.s32.totalorder 1, %s22
    %p462 = scmp.lt.s32.totalorder %s22, 3
    %p463 = pnand %p461, %p462
    %p464 = pneg %p463
    // Predicated region
    $region81: #{my_vgg_forward.1} parent=5 // pred_check
      _
    $region82: #{my_vgg_forward.1} parent=5 // pred_check_branch
      %466 = sbr.rel (%p463) target = $region84
    $region83: #{my_vgg_forward.1} parent=5 // pred_region
      %s467 = ssub.s32 %s22, 1
      %p468 = scmp.lt.s32.totalorder %s27, 1
      %s469 = scalar_select %p468, %s27, 1
      %s470 = smul.addr %s469, 2
      %s471 = smul.addr %s470, 8
      %s472 = scalar_lea.vmem %s0, %s471
      %p473 = pneg %p48
      %p474 = pneg %p45
      %p475 = pneg %p69
      %p476 = pneg %p66
      %p477 = pneg %p90
      %p478 = pneg %p87
      %p479 = pneg %p111
      %p480 = pneg %p108
      %p481 = pneg %p132
      %p482 = pneg %p129
      %p483 = pneg %p153
      %p484 = pneg %p150
      %p485 = pneg %p174
      %p486 = pneg %p171
      %p487 = pneg %p195
      %p488 = pneg %p192
      %p489 = pneg %p216
      %p490 = pneg %p213
      %p491 = pneg %p237
      %p492 = pneg %p234
      %p493 = pneg %p258
      %p494 = pneg %p255
      %p495 = pneg %p279
      %p496 = pneg %p276
      %p497 = pneg %p300
      %p498 = pneg %p297
      %p499 = pneg %p321
      %p500 = pneg %p318
      %p501 = pneg %p342
      %p502 = pneg %p339
      %p503 = pneg %p363
      %p504 = pneg %p360
      %p505 = pneg %p389
      %p506 = pneg %p386
      %p507 = scmp.lt.s32.totalorder %s27, 1
      %s508 = scalar_select %p507, %s27, 1
      %s509 = smul.addr %s508, 4
      %s510 = smul.addr %s509, 8
      %s511 = scalar_lea.vmem %s16, %s510
      %p512 = scmp.lt.s32.totalorder %s27, 1
      %s513 = scalar_select %p512, %s27, 1
      %s514 = smul.addr %s513, 2
      %s515 = smul.addr %s514, 8
      %s516 = scalar_lea.vmem %s0, %s515
      %p517 = scmp.lt.s32.totalorder %s27, 1
      %s518 = scalar_select %p517, %s27, 1
      %s519 = smul.addr %s518, 4
      %s520 = smul.addr %s519, 8
      %s521 = scalar_lea.vmem %s16, %s520
      %v522 = vld [vmem:[%s516] sm:$0xff]
      %v523 = vld [vmem:[%s516 + $0x8] sm:$0xff]
      %v524 = vld [vmem:[%s1] sm:$0xff]
      %v525 = vld [vmem:[%s2] sm:$0xff]
      %v526 = vld [vmem:[%s3] sm:$0xf]
      %v528 = vlaneseq
      %v529 = vshrl.u32 %v528, 7
      %v530 = vsub.s32 0, %v529
      %v531 = vrot.slane %v526, %v530
      %v532 = vlaneseq
      %v533 = vshrl.u32 %v532, 7
      %v534 = vsub.s32 2, %v533
      %v535 = vrot.slane %v526, %v534
      %v538 = vlaneseq
      %v539 = vshrl.u32 %v538, 7
      %v540 = vsub.s32 0, %v539
      %v541 = vrot.slane %v531, %v540
      %v542 = vlaneseq
      %v543 = vshrl.u32 %v542, 7
      %v544 = vsub.s32 0, %v543
      %v545 = vrot.slane %v535, %v544
      %548 = vrot.lane.b32.xlu0 %v541, 111
      %v549 = vpop.permute.xlu0 %548
      %550 = vrot.lane.b32.xlu0 %v545, 111
      %v551 = vpop.permute.xlu0 %550
      %vm552 = vcmask 908288
      %v553 = vsel %vm552, %v549, %v551
      %v557 = vmul.f32 %v549, 0.0
      %v558 = vmul.f32 %v522, %v553
      %v559 = vmul.f32 %v523, %v551
      %v560 = vlaneseq
      %v561 = vshrl.u32 %v560, 7
      %v562 = vsub.s32 1, %v561
      %v563 = vrot.slane %v526, %v562
      %v564 = vlaneseq
      %v565 = vshrl.u32 %v564, 7
      %v566 = vsub.s32 3, %v565
      %v567 = vrot.slane %v526, %v566
      %v570 = vlaneseq
      %v571 = vshrl.u32 %v570, 7
      %v572 = vsub.s32 1, %v571
      %v573 = vrot.slane %v563, %v572
      %v574 = vlaneseq
      %v575 = vshrl.u32 %v574, 7
      %v576 = vsub.s32 1, %v575
      %v577 = vrot.slane %v567, %v576
      %580 = vrot.lane.b32.xlu0 %v573, 113
      %v581 = vpop.permute.xlu0 %580
      %582 = vrot.lane.b32.xlu0 %v577, 113
      %v583 = vpop.permute.xlu0 %582
      %vm584 = vcmask 924672
      %v585 = vsel %vm584, %v581, %v583
      %v589 = vmul.f32 %v581, 0.0
      %v590 = vmul.f32 %v522, %v585
      %v591 = vmul.f32 %v523, %v583
      %592 = vrot.lane.b32.xlu0 %v541, 127
      %v593 = vpop.permute.xlu0 %592
      %594 = vrot.lane.b32.xlu0 %v545, 127
      %v595 = vpop.permute.xlu0 %594
      %vm596 = vcmask 1039360
      %v597 = vsel %vm596, %v593, %v595
      %v601 = vmul.f32 %v593, 0.0
      %v602 = vmul.f32 %v522, %v597
      %v603 = vmul.f32 %v523, %v595
      %604 = vrot.lane.b32.xlu0 %v573, 1
      %v605 = vpop.permute.xlu0 %604
      %606 = vrot.lane.b32.xlu0 %v577, 1
      %v607 = vpop.permute.xlu0 %606
      %vm608 = vcmask 7168
      %v609 = vsel %vm608, %v605, %v607
      %v613 = vmul.f32 %v522, %v605
      %v614 = vmul.f32 %v523, %v609
      %v615 = vmul.f32 %v607, 0.0
      %616 = vrot.lane.b32.xlu0 %v541, 15
      %v617 = vpop.permute.xlu0 %616
      %618 = vrot.lane.b32.xlu0 %v545, 15
      %v619 = vpop.permute.xlu0 %618
      %vm620 = vcmask 121856
      %v621 = vsel %vm620, %v617, %v619
      %v625 = vmul.f32 %v522, %v617
      %v626 = vmul.f32 %v523, %v621
      %v627 = vmul.f32 %v619, 0.0
      %628 = vrot.lane.b32.xlu0 %v573, 17
      %v629 = vpop.permute.xlu0 %628
      %630 = vrot.lane.b32.xlu0 %v577, 17
      %v631 = vpop.permute.xlu0 %630
      %vm632 = vcmask 138240
      %v633 = vsel %vm632, %v629, %v631
      %v637 = vmul.f32 %v522, %v629
      %v638 = vmul.f32 %v523, %v633
      %v639 = vmul.f32 %v631, 0.0
      %643 = vrot.lane.b32.xlu0 0.0, 127
      %v644 = vpop.permute.xlu0 %643
      %645 = vrot.lane.b32.xlu0 %v522, 127
      %v646 = vpop.permute.xlu0 %645
      %647 = vrot.lane.b32.xlu0 %v523, 127
      %v648 = vpop.permute.xlu0 %647
      %v649 = vsel %vm596, %v644, %v646
      %v650 = vsel %vm596, %v646, %v648
      %654 = vrot.lane.b32.xlu0 %v589, 126
      %v655 = vpop.permute.xlu0 %654
      %656 = vrot.lane.b32.xlu0 %v590, 126
      %v657 = vpop.permute.xlu0 %656
      %658 = vrot.lane.b32.xlu0 %v591, 126
      %v659 = vpop.permute.xlu0 %658
      %vm660 = vcmask 1031168
      %v661 = vsel %vm660, %v655, %v657
      %v662 = vsel %vm660, %v657, %v659
      %666 = vrot.lane.b32.xlu0 %v601, 112
      %v667 = vpop.permute.xlu0 %666
      %668 = vrot.lane.b32.xlu0 %v602, 112
      %v669 = vpop.permute.xlu0 %668
      %670 = vrot.lane.b32.xlu0 %v603, 112
      %v671 = vpop.permute.xlu0 %670
      %vm672 = vcmask 916480
      %v673 = vsel %vm672, %v667, %v669
      %v674 = vsel %vm672, %v669, %v671
      %675 = vrot.lane.b32.xlu0 %v522, 111
      %v676 = vpop.permute.xlu0 %675
      %677 = vrot.lane.b32.xlu0 %v523, 111
      %v678 = vpop.permute.xlu0 %677
      %v679 = vsel %vm552, %v676, %v678
      %683 = vrot.lane.b32.xlu0 %v613, 110
      %v684 = vpop.permute.xlu0 %683
      %685 = vrot.lane.b32.xlu0 %v614, 110
      %v686 = vpop.permute.xlu0 %685
      %687 = vrot.lane.b32.xlu0 %v615, 110
      %v688 = vpop.permute.xlu0 %687
      %vm689 = vcmask 900096
      %v690 = vsel %vm689, %v684, %v686
      %v691 = vsel %vm689, %v686, %v688
      %695 = vrot.lane.b32.xlu0 %v625, 96
      %v696 = vpop.permute.xlu0 %695
      %697 = vrot.lane.b32.xlu0 %v626, 96
      %v698 = vpop.permute.xlu0 %697
      %699 = vrot.lane.b32.xlu0 %v627, 96
      %v700 = vpop.permute.xlu0 %699
      %vm701 = vcmask 785408
      %v702 = vsel %vm701, %v696, %v698
      %v703 = vsel %vm701, %v698, %v700
      %704 = vrot.lane.b32.xlu0 %v522, 95
      %v705 = vpop.permute.xlu0 %704
      %706 = vrot.lane.b32.xlu0 %v523, 95
      %v707 = vpop.permute.xlu0 %706
      %708 = vrot.lane.b32.xlu0 0.0, 95
      %v709 = vpop.permute.xlu0 %708
      %vm710 = vcmask 777216
      %v711 = vsel %vm710, %v705, %v707
      %v712 = vsel %vm710, %v707, %v709
      %716 = vrot.lane.b32.xlu0 %v637, 94
      %v717 = vpop.permute.xlu0 %716
      %718 = vrot.lane.b32.xlu0 %v638, 94
      %v719 = vpop.permute.xlu0 %718
      %720 = vrot.lane.b32.xlu0 %v639, 94
      %v721 = vpop.permute.xlu0 %720
      %vm722 = vcmask 769024
      %v723 = vsel %vm722, %v717, %v719
      %v724 = vsel %vm722, %v719, %v721
      %726 = vset.pattern.permute.xlu0 0
      %727 = vperm.xlu0 %726, %v525
      %v728 = vpop.permute.xlu0 %727
      %733 = vrot.lane.b32.xlu0 %v557, 17
      %v734 = vpop.permute.xlu0 %733
      %735 = vrot.lane.b32.xlu0 %v558, 17
      %v736 = vpop.permute.xlu0 %735
      %737 = vrot.lane.b32.xlu0 %v559, 17
      %v738 = vpop.permute.xlu0 %737
      %739 = vrot.lane.b32.xlu0 %v649, 17
      %v740 = vpop.permute.xlu0 %739
      %741 = vrot.lane.b32.xlu0 %v650, 17
      %v742 = vpop.permute.xlu0 %741
      %743 = vrot.lane.b32.xlu0 %v648, 17
      %v744 = vpop.permute.xlu0 %743
      %745 = vrot.lane.b32.xlu0 %v661, 17
      %v746 = vpop.permute.xlu0 %745
      %747 = vrot.lane.b32.xlu0 %v662, 17
      %v748 = vpop.permute.xlu0 %747
      %749 = vrot.lane.b32.xlu0 %v659, 17
      %v750 = vpop.permute.xlu0 %749
      %751 = vrot.lane.b32.xlu0 %v673, 17
      %v752 = vpop.permute.xlu0 %751
      %753 = vrot.lane.b32.xlu0 %v674, 17
      %v754 = vpop.permute.xlu0 %753
      %755 = vrot.lane.b32.xlu0 %v671, 17
      %v756 = vpop.permute.xlu0 %755
      %757 = vrot.lane.b32.xlu0 %v676, 17
      %v758 = vpop.permute.xlu0 %757
      %759 = vrot.lane.b32.xlu0 %v679, 17
      %v760 = vpop.permute.xlu0 %759
      %761 = vrot.lane.b32.xlu0 %v678, 17
      %v762 = vpop.permute.xlu0 %761
      %763 = vrot.lane.b32.xlu0 %v684, 17
      %v764 = vpop.permute.xlu0 %763
      %765 = vrot.lane.b32.xlu0 %v690, 17
      %v766 = vpop.permute.xlu0 %765
      %767 = vrot.lane.b32.xlu0 %v691, 17
      %v768 = vpop.permute.xlu0 %767
      %769 = vrot.lane.b32.xlu0 %v696, 17
      %v770 = vpop.permute.xlu0 %769
      %771 = vrot.lane.b32.xlu0 %v702, 17
      %v772 = vpop.permute.xlu0 %771
      %773 = vrot.lane.b32.xlu0 %v703, 17
      %v774 = vpop.permute.xlu0 %773
      %775 = vrot.lane.b32.xlu0 %v705, 17
      %v776 = vpop.permute.xlu0 %775
      %777 = vrot.lane.b32.xlu0 %v711, 17
      %v778 = vpop.permute.xlu0 %777
      %779 = vrot.lane.b32.xlu0 %v712, 17
      %v780 = vpop.permute.xlu0 %779
      %781 = vrot.lane.b32.xlu0 %v717, 17
      %v782 = vpop.permute.xlu0 %781
      %783 = vrot.lane.b32.xlu0 %v723, 17
      %v784 = vpop.permute.xlu0 %783
      %785 = vrot.lane.b32.xlu0 %v724, 17
      %v786 = vpop.permute.xlu0 %785
      %v787 = vsel %vm632, %v734, %v736
      %v788 = vsel %vm632, %v736, %v738
      %v789 = vsel %vm632, %v740, %v742
      %v790 = vsel %vm632, %v742, %v744
      %v791 = vsel %vm632, %v746, %v748
      %v792 = vsel %vm632, %v748, %v750
      %v793 = vsel %vm632, %v752, %v754
      %v794 = vsel %vm632, %v754, %v756
      %v795 = vsel %vm632, %v758, %v760
      %v796 = vsel %vm632, %v760, %v762
      %v797 = vsel %vm632, %v764, %v766
      %v798 = vsel %vm632, %v766, %v768
      %v799 = vsel %vm632, %v770, %v772
      %v800 = vsel %vm632, %v772, %v774
      %v801 = vsel %vm632, %v776, %v778
      %v802 = vsel %vm632, %v778, %v780
      %v803 = vsel %vm632, %v782, %v784
      %v804 = vsel %vm632, %v784, %v786
      %vm823 = vcmask 588800
      %v825 = vsel %vm823, %v524, 0
      %827 = vmatprep.subr.mxu0 %v788
      %828 = vmatpush1.msra.mxu0 %v787
      %829 = vmatprep.subr.mxu0 %v790
      %830 = vmatpush1.msra.mxu0 %v789
      %831 = vmatprep.subr.mxu0 %v792
      %832 = vmatpush1.msra.mxu0 %v791
      %833 = vmatprep.subr.mxu0 %v794
      %834 = vmatpush1.msra.mxu0 %v793
      %835 = vmatprep.subr.mxu0 %v796
      %836 = vmatpush1.msra.mxu0 %v795
      %837 = vmatprep.subr.mxu0 %v798
      %838 = vmatpush1.msra.mxu0 %v797
      %839 = vmatprep.subr.mxu0 %v800
      %840 = vmatpush1.msra.mxu0 %v799
      %841 = vmatprep.subr.mxu0 %v802
      %842 = vmatpush1.msra.mxu0 %v801
      %843 = vmatprep.subr.mxu0 %v804
      %844 = vmatpush1.msra.mxu0 %v803
      %845 = vmatprep.subr.mxu0 0.0
      %846 = vmatpush1.msra.mxu0 0.0
      %847 = vmatprep.subr.mxu0 0.0
      %848 = vmatpush1.msra.mxu0 0.0
      %849 = vmatprep.subr.mxu0 0.0
      %850 = vmatpush1.msra.mxu0 0.0
      %851 = vmatprep.subr.mxu0 0.0
      %852 = vmatpush1.msra.mxu0 0.0
      %853 = vmatprep.subr.mxu0 0.0
      %854 = vmatpush1.msra.mxu0 0.0
      %855 = vmatprep.subr.mxu0 0.0
      %856 = vmatpush1.msra.mxu0 0.0
      %857 = vmatprep.subr.mxu0 0.0
      %858 = vmatpush1.msra.mxu0 0.0
      %859 = vmatprep.subr.mxu0 0.0
      %860 = vmatpush1.msra.mxu0 0.0
      %861 = vmatprep.subr.mxu0 0.0
      %862 = vmatpush1.msra.mxu0 0.0
      %863 = vmatprep.subr.mxu0 0.0
      %864 = vmatpush1.msra.mxu0 0.0
      %865 = vmatprep.subr.mxu0 0.0
      %866 = vmatpush1.msra.mxu0 0.0
      %867 = vmatprep.subr.mxu0 0.0
      %868 = vmatpush1.msra.mxu0 0.0
      %869 = vmatprep.subr.mxu0 0.0
      %870 = vmatpush1.msra.mxu0 0.0
      %871 = vmatprep.subr.mxu0 0.0
      %872 = vmatpush1.msra.mxu0 0.0
      %873 = vmatprep.subr.mxu0 0.0
      %874 = vmatpush1.msra.mxu0 0.0
      %875 = vmatprep.subr.mxu0 0.0
      %876 = vmatpush1.msra.mxu0 0.0
      %877 = vmatprep.subr.mxu0 0.0
      %878 = vmatpush1.msra.mxu0 0.0
      %879 = vmatprep.subr.mxu0 0.0
      %880 = vmatpush1.msra.mxu0 0.0
      %881 = vmatprep.subr.mxu0 0.0
      %882 = vmatpush1.msra.mxu0 0.0
      %883 = vmatprep.subr.mxu0 0.0
      %884 = vmatpush1.msra.mxu0 0.0
      %885 = vmatprep.subr.mxu0 0.0
      %886 = vmatpush1.msra.mxu0 0.0
      %887 = vmatprep.subr.mxu0 0.0
      %888 = vmatpush1.msra.mxu0 0.0
      %889 = vmatprep.subr.mxu0 0.0
      %890 = vmatpush1.msra.mxu0 0.0
      %891 = vmatprep.mubr.f32.mxu0 0.0
      %892 = vmatmul.mubr.f32.gmra.mrb[0].mxu0 %v825
      %v893 = vpop.f32.mrb[0].mxu0
      %v894 = vadd.f32 %v728, %v893
      %v895 = vpop.f32.mrb[0].mxu0
      %v896 = vadd.f32 %v728, %v895
      %897 = vdwg.mxu0
      %v898 = vmax.f32 %v894, 0.0
      %v899 = vmax.f32 %v896, 0.0
      %v900 = vld [vmem:[%s4] sm:$0xff]
      %v901 = vld [vmem:[%s4 + $0x8] sm:$0xff]
      %v902 = vld [vmem:[%s4 + $0x10] sm:$0xff]
      %v903 = vld [vmem:[%s4 + $0x18] sm:$0xff]
      %v904 = vld [vmem:[%s4 + $0x20] sm:$0xff]
      %v905 = vld [vmem:[%s4 + $0x28] sm:$0xff]
      %v906 = vld [vmem:[%s4 + $0x30] sm:$0xff]
      %v907 = vld [vmem:[%s4 + $0x38] sm:$0xff]
      %v908 = vld [vmem:[%s4 + $0x40] sm:$0xff]
      %v909 = vld [vmem:[%s4 + $0x48] sm:$0xff]
      %v910 = vld [vmem:[%s4 + $0x50] sm:$0xff]
      %v911 = vld [vmem:[%s4 + $0x58] sm:$0xff]
      %v912 = vld [vmem:[%s4 + $0x60] sm:$0xff]
      %v913 = vld [vmem:[%s4 + $0x68] sm:$0xff]
      %v914 = vld [vmem:[%s4 + $0x70] sm:$0xff]
      %v915 = vld [vmem:[%s4 + $0x78] sm:$0xff]
      %v916 = vld [vmem:[%s4 + $0x80] sm:$0xff]
      %v917 = vld [vmem:[%s4 + $0x88] sm:$0xff]
      %v918 = vld [vmem:[%s4 + $0x90] sm:$0xff]
      %v919 = vld [vmem:[%s4 + $0x98] sm:$0xff]
      %v920 = vld [vmem:[%s4 + $0xa0] sm:$0xff]
      %v921 = vld [vmem:[%s4 + $0xa8] sm:$0xff]
      %v922 = vld [vmem:[%s4 + $0xb0] sm:$0xff]
      %v923 = vld [vmem:[%s4 + $0xb8] sm:$0xff]
      %v924 = vld [vmem:[%s4 + $0xc0] sm:$0xff]
      %v925 = vld [vmem:[%s4 + $0xc8] sm:$0xff]
      %v926 = vld [vmem:[%s4 + $0xd0] sm:$0xff]
      %v927 = vld [vmem:[%s4 + $0xd8] sm:$0xff]
      %v928 = vld [vmem:[%s4 + $0xe0] sm:$0xff]
      %v929 = vld [vmem:[%s4 + $0xe8] sm:$0x7f]
      %932 = vrot.lane.b32.xlu0 %v898, 127
      %v933 = vpop.permute.xlu0 %932
      %934 = vrot.lane.b32.xlu0 %v899, 127
      %v935 = vpop.permute.xlu0 %934
      %v936 = vsel %vm596, %v933, %v935
      %v939 = vmax.f32 %v898, %v936
      %v940 = vmax.f32 %v899, %v935
      %943 = vrot.lane.b32.xlu0 %v939, 112
      %v944 = vpop.permute.xlu0 %943
      %945 = vrot.lane.b32.xlu0 %v940, 112
      %v946 = vpop.permute.xlu0 %945
      %v947 = vsel %vm672, %v944, %v946
      %v950 = vmax.f32 %v939, %v947
      %v951 = vmax.f32 %v940, %v946
      %v953 = vsel %vm552, %v951, 0
      %vm955 = vcmask 1046528
      %v957 = vsel %vm955, %v929, 0
      %959 = vmatprep.subr.mxu0 0.0
      %960 = vmatpush1.msra.mxu0 %v900
      %961 = vmatprep.subr.mxu0 0.0
      %962 = vmatpush1.msra.mxu0 %v901
      %963 = vmatprep.subr.mxu0 0.0
      %964 = vmatpush1.msra.mxu0 %v902
      %965 = vmatprep.subr.mxu0 0.0
      %966 = vmatpush1.msra.mxu0 %v903
      %967 = vmatprep.subr.mxu0 0.0
      %968 = vmatpush1.msra.mxu0 %v904
      %969 = vmatprep.subr.mxu0 0.0
      %970 = vmatpush1.msra.mxu0 %v905
      %971 = vmatprep.subr.mxu0 0.0
      %972 = vmatpush1.msra.mxu0 %v906
      %973 = vmatprep.subr.mxu0 0.0
      %974 = vmatpush1.msra.mxu0 %v907
      %975 = vmatprep.subr.mxu0 0.0
      %976 = vmatpush1.msra.mxu0 %v908
      %977 = vmatprep.subr.mxu0 0.0
      %978 = vmatpush1.msra.mxu0 %v909
      %979 = vmatprep.subr.mxu0 0.0
      %980 = vmatpush1.msra.mxu0 %v910
      %981 = vmatprep.subr.mxu0 0.0
      %982 = vmatpush1.msra.mxu0 %v911
      %983 = vmatprep.subr.mxu0 0.0
      %984 = vmatpush1.msra.mxu0 %v912
      %985 = vmatprep.subr.mxu0 0.0
      %986 = vmatpush1.msra.mxu0 %v913
      %987 = vmatprep.subr.mxu0 0.0
      %988 = vmatpush1.msra.mxu0 %v914
      %989 = vmatprep.subr.mxu0 0.0
      %990 = vmatpush1.msra.mxu0 %v915
      %991 = vmatprep.subr.mxu0 0.0
      %992 = vmatpush1.msra.mxu0 %v916
      %993 = vmatprep.subr.mxu0 0.0
      %994 = vmatpush1.msra.mxu0 %v917
      %995 = vmatprep.subr.mxu0 0.0
      %996 = vmatpush1.msra.mxu0 %v918
      %997 = vmatprep.subr.mxu0 0.0
      %998 = vmatpush1.msra.mxu0 %v919
      %999 = vmatprep.subr.mxu0 0.0
      %1000 = vmatpush1.msra.mxu0 %v920
      %1001 = vmatprep.subr.mxu0 0.0
      %1002 = vmatpush1.msra.mxu0 %v921
      %1003 = vmatprep.subr.mxu0 0.0
      %1004 = vmatpush1.msra.mxu0 %v922
      %1005 = vmatprep.subr.mxu0 0.0
      %1006 = vmatpush1.msra.mxu0 %v923
      %1007 = vmatprep.subr.mxu0 0.0
      %1008 = vmatpush1.msra.mxu0 %v924
      %1009 = vmatprep.subr.mxu0 0.0
      %1010 = vmatpush1.msra.mxu0 %v925
      %1011 = vmatprep.subr.mxu0 0.0
      %1012 = vmatpush1.msra.mxu0 %v926
      %1013 = vmatprep.subr.mxu0 0.0
      %1014 = vmatpush1.msra.mxu0 %v927
      %1015 = vmatprep.subr.mxu0 0.0
      %1016 = vmatpush1.msra.mxu0 %v928
      %1017 = vmatprep.subr.mxu0 0.0
      %1018 = vmatpush1.msra.mxu0 %v957
      %1019 = vmatprep.subr.mxu0 0.0
      %1020 = vmatpush1.msra.mxu0 0.0
      %1021 = vmatprep.subr.mxu0 0.0
      %1022 = vmatpush1.msra.mxu0 0.0
      %1023 = vmatprep.mubr.f32.mxu0 %v953
      %1024 = vmatmul.mubr.f32.gmra.mrb[0].mxu0 %v950
      %v1025 = vpop.f32.mrb[0].mxu0
      %v1026 = vadd.f32 0.0, %v1025
      %v1027 = vpop.f32.mrb[0].mxu0
      %1028 = vdwg.mxu0
      %v1029 = vld [vmem:[%s5] sm:$0xff]
      %v1030 = vld [vmem:[%s5 + $0x8] sm:$0xff]
      %v1031 = vld [vmem:[%s6] sm:$0xff]
      %v1032 = vld [vmem:[%s6 + $0x8] sm:$0xff]
      %v1033 = vld [vmem:[%s7] sm:$0x3]
      %vm1034 = vcmask 523264
      %v1035 = vsel %vm1034, %v1026, 0.0
      %v1036 = vlaneseq
      %v1037 = vshrl.u32 %v1036, 7
      %v1038 = vsub.s32 0, %v1037
      %v1039 = vrot.slane %v1033, %v1038
      %1041 = vrot.lane.b32.xlu0 %v1039, 119
      %v1042 = vpop.permute.xlu0 %1041
      %v1044 = vmul.f32 %v1042, 0.0
      %v1045 = vmul.f32 %v1035, %v1042
      %v1046 = vlaneseq
      %v1047 = vshrl.u32 %v1046, 7
      %v1048 = vsub.s32 1, %v1047
      %v1049 = vrot.slane %v1033, %v1048
      %1051 = vrot.lane.b32.xlu0 %v1049, 121
      %v1052 = vpop.permute.xlu0 %1051
      %v1054 = vmul.f32 %v1052, 0.0
      %v1055 = vmul.f32 %v1035, %v1052
      %1056 = vrot.lane.b32.xlu0 %v1039, 127
      %v1057 = vpop.permute.xlu0 %1056
      %v1059 = vmul.f32 %v1057, 0.0
      %v1060 = vmul.f32 %v1035, %v1057
      %1061 = vrot.lane.b32.xlu0 %v1049, 1
      %v1062 = vpop.permute.xlu0 %1061
      %v1064 = vmul.f32 %v1035, %v1062
      %1065 = vrot.lane.b32.xlu0 %v1039, 7
      %v1066 = vpop.permute.xlu0 %1065
      %v1068 = vmul.f32 %v1035, %v1066
      %1069 = vrot.lane.b32.xlu0 %v1049, 9
      %v1070 = vpop.permute.xlu0 %1069
      %v1072 = vmul.f32 %v1035, %v1070
      %1074 = vrot.lane.b32.xlu0 %v1035, 127
      %v1075 = vpop.permute.xlu0 %1074
      %v1076 = vsel %vm596, %v644, %v1075
      %1079 = vrot.lane.b32.xlu0 %v1054, 126
      %v1080 = vpop.permute.xlu0 %1079
      %1081 = vrot.lane.b32.xlu0 %v1055, 126
      %v1082 = vpop.permute.xlu0 %1081
      %v1083 = vsel %vm660, %v1080, %v1082
      %1086 = vrot.lane.b32.xlu0 %v1059, 120
      %v1087 = vpop.permute.xlu0 %1086
      %1088 = vrot.lane.b32.xlu0 %v1060, 120
      %v1089 = vpop.permute.xlu0 %1088
      %vm1090 = vcmask 982016
      %v1091 = vsel %vm1090, %v1087, %v1089
      %1092 = vrot.lane.b32.xlu0 %v1035, 119
      %v1093 = vpop.permute.xlu0 %1092
      %1095 = vrot.lane.b32.xlu0 %v1064, 118
      %v1096 = vpop.permute.xlu0 %1095
      %1098 = vrot.lane.b32.xlu0 %v1068, 112
      %v1099 = vpop.permute.xlu0 %1098
      %1100 = vrot.lane.b32.xlu0 %v1035, 111
      %v1101 = vpop.permute.xlu0 %1100
      %1103 = vrot.lane.b32.xlu0 %v1072, 110
      %v1104 = vpop.permute.xlu0 %1103
      %1106 = vset.pattern.permute.xlu0 0
      %1107 = vperm.xlu0 %1106, %v1031
      %v1108 = vpop.permute.xlu0 %1107
      %1111 = vset.pattern.permute.xlu0 0
      %1112 = vperm.xlu0 %1111, %v1032
      %v1113 = vpop.permute.xlu0 %1112
      %1117 = vrot.lane.b32.xlu0 %v1044, 9
      %v1118 = vpop.permute.xlu0 %1117
      %1119 = vrot.lane.b32.xlu0 %v1045, 9
      %v1120 = vpop.permute.xlu0 %1119
      %1121 = vrot.lane.b32.xlu0 %v1076, 9
      %v1122 = vpop.permute.xlu0 %1121
      %1123 = vrot.lane.b32.xlu0 %v1075, 9
      %v1124 = vpop.permute.xlu0 %1123
      %1125 = vrot.lane.b32.xlu0 %v1083, 9
      %v1126 = vpop.permute.xlu0 %1125
      %1127 = vrot.lane.b32.xlu0 %v1082, 9
      %v1128 = vpop.permute.xlu0 %1127
      %1129 = vrot.lane.b32.xlu0 %v1091, 9
      %v1130 = vpop.permute.xlu0 %1129
      %1131 = vrot.lane.b32.xlu0 %v1089, 9
      %v1132 = vpop.permute.xlu0 %1131
      %1133 = vrot.lane.b32.xlu0 %v1093, 9
      %v1134 = vpop.permute.xlu0 %1133
      %1135 = vrot.lane.b32.xlu0 %v1096, 9
      %v1136 = vpop.permute.xlu0 %1135
      %1137 = vrot.lane.b32.xlu0 %v1099, 9
      %v1138 = vpop.permute.xlu0 %1137
      %1139 = vrot.lane.b32.xlu0 %v1101, 9
      %v1140 = vpop.permute.xlu0 %1139
      %1141 = vrot.lane.b32.xlu0 %v1104, 9
      %v1142 = vpop.permute.xlu0 %1141
      %vm1143 = vcmask 72704
      %v1144 = vsel %vm1143, %v1118, %v1120
      %v1145 = vsel %vm1143, %v1122, %v1124
      %v1146 = vsel %vm1143, %v1126, %v1128
      %v1147 = vsel %vm1143, %v1130, %v1132
      %v1158 = vsel %vm823, %v1029, 0
      %v1161 = vsel %vm823, %v1030, 0
      %1163 = vmatprep.subr.mxu0 0.0
      %1164 = vmatpush1.msra.mxu0 %v1144
      %1165 = vmatprep.subr.mxu0 0.0
      %1166 = vmatpush1.msra.mxu0 %v1145
      %1167 = vmatprep.subr.mxu0 0.0
      %1168 = vmatpush1.msra.mxu0 %v1146
      %1169 = vmatprep.subr.mxu0 0.0
      %1170 = vmatpush1.msra.mxu0 %v1147
      %1171 = vmatprep.subr.mxu0 0.0
      %1172 = vmatpush1.msra.mxu0 %v1134
      %1173 = vmatprep.subr.mxu0 0.0
      %1174 = vmatpush1.msra.mxu0 %v1136
      %1175 = vmatprep.subr.mxu0 0.0
      %1176 = vmatpush1.msra.mxu0 %v1138
      %1177 = vmatprep.subr.mxu0 0.0
      %1178 = vmatpush1.msra.mxu0 %v1140
      %1179 = vmatprep.subr.mxu0 0.0
      %1180 = vmatpush1.msra.mxu0 %v1142
      %1181 = vmatprep.subr.mxu0 0.0
      %1182 = vmatpush1.msra.mxu0 0.0
      %1183 = vmatprep.subr.mxu0 0.0
      %1184 = vmatpush1.msra.mxu0 0.0
      %1185 = vmatprep.subr.mxu0 0.0
      %1186 = vmatpush1.msra.mxu0 0.0
      %1187 = vmatprep.subr.mxu0 0.0
      %1188 = vmatpush1.msra.mxu0 0.0
      %1189 = vmatprep.subr.mxu0 0.0
      %1190 = vmatpush1.msra.mxu0 0.0
      %1191 = vmatprep.subr.mxu0 0.0
      %1192 = vmatpush1.msra.mxu0 0.0
      %1193 = vmatprep.subr.mxu0 0.0
      %1194 = vmatpush1.msra.mxu0 0.0
      %1195 = vmatprep.subr.mxu0 0.0
      %1196 = vmatpush1.msra.mxu0 0.0
      %1197 = vmatprep.subr.mxu0 0.0
      %1198 = vmatpush1.msra.mxu0 0.0
      %1199 = vmatprep.subr.mxu0 0.0
      %1200 = vmatpush1.msra.mxu0 0.0
      %1201 = vmatprep.subr.mxu0 0.0
      %1202 = vmatpush1.msra.mxu0 0.0
      %1203 = vmatprep.subr.mxu0 0.0
      %1204 = vmatpush1.msra.mxu0 0.0
      %1205 = vmatprep.subr.mxu0 0.0
      %1206 = vmatpush1.msra.mxu0 0.0
      %1207 = vmatprep.subr.mxu0 0.0
      %1208 = vmatpush1.msra.mxu0 0.0
      %1209 = vmatprep.subr.mxu0 0.0
      %1210 = vmatpush1.msra.mxu0 0.0
      %1211 = vmatprep.subr.mxu0 0.0
      %1212 = vmatpush1.msra.mxu0 0.0
      %1213 = vmatprep.subr.mxu0 0.0
      %1214 = vmatpush1.msra.mxu0 0.0
      %1215 = vmatprep.subr.mxu0 0.0
      %1216 = vmatpush1.msra.mxu0 0.0
      %1217 = vmatprep.subr.mxu0 0.0
      %1218 = vmatpush1.msra.mxu0 0.0
      %1219 = vmatprep.subr.mxu0 0.0
      %1220 = vmatpush1.msra.mxu0 0.0
      %1221 = vmatprep.subr.mxu0 0.0
      %1222 = vmatpush1.msra.mxu0 0.0
      %1223 = vmatprep.subr.mxu0 0.0
      %1224 = vmatpush1.msra.mxu0 0.0
      %1225 = vmatprep.subr.mxu0 0.0
      %1226 = vmatpush1.msra.mxu0 0.0
      %1227 = vmatprep.mubr.f32.mxu0 0.0
      %1228 = vmatmul.mubr.f32.gmra.mrb[0].mxu0 %v1158
      %v1229 = vpop.f32.mrb[0].mxu0
      %v1230 = vadd.f32 %v1108, %v1229
      %v1231 = vpop.f32.mrb[0].mxu0
      %1232 = vmatprep.mubr.f32.mxu0 0.0
      %1233 = vmatmul.mubr.f32.gmra.mrb[0].mxu0 %v1161
      %v1234 = vpop.f32.mrb[0].mxu0
      %v1235 = vadd.f32 %v1113, %v1234
      %v1236 = vpop.f32.mrb[0].mxu0
      %1237 = vdwg.mxu0
      %v1238 = vmax.f32 %v1230, 0.0
      %v1239 = vmax.f32 %v1235, 0.0
      %v1240 = vld [vmem:[%s8] sm:$0xff]
      %v1241 = vld [vmem:[%s8 + $0x8] sm:$0xff]
      %v1242 = vld [vmem:[%s8 + $0x10] sm:$0xff]
      %v1243 = vld [vmem:[%s8 + $0x18] sm:$0xff]
      %v1244 = vld [vmem:[%s8 + $0x20] sm:$0xff]
      %v1245 = vld [vmem:[%s8 + $0x28] sm:$0xff]
      %v1246 = vld [vmem:[%s8 + $0x30] sm:$0x7f]
      %1249 = vrot.lane.b32.xlu0 %v1238, 127
      %v1250 = vpop.permute.xlu0 %1249
      %1251 = vrot.lane.b32.xlu0 %v1239, 127
      %v1252 = vpop.permute.xlu0 %1251
      %v1255 = vmax.f32 %v1238, %v1250
      %v1256 = vmax.f32 %v1239, %v1252
      %1259 = vrot.lane.b32.xlu0 %v1255, 120
      %v1260 = vpop.permute.xlu0 %1259
      %1261 = vrot.lane.b32.xlu0 %v1256, 120
      %v1262 = vpop.permute.xlu0 %1261
      %v1265 = vmax.f32 %v1255, %v1260
      %v1266 = vmax.f32 %v1256, %v1262
      %vm1267 = vcmask 449536
      %v1269 = vsel %vm1267, %v1265, 0
      %v1272 = vsel %vm1267, %v1266, 0
      %v1275 = vsel %vm955, %v1246, 0
      %1277 = vmatprep.subr.mxu0 0.0
      %1278 = vmatpush1.msra.mxu0 %v1240
      %1279 = vmatprep.subr.mxu0 0.0
      %1280 = vmatpush1.msra.mxu0 %v1241
      %1281 = vmatprep.subr.mxu0 0.0
      %1282 = vmatpush1.msra.mxu0 %v1242
      %1283 = vmatprep.subr.mxu0 0.0
      %1284 = vmatpush1.msra.mxu0 %v1243
      %1285 = vmatprep.subr.mxu0 0.0
      %1286 = vmatpush1.msra.mxu0 %v1244
      %1287 = vmatprep.subr.mxu0 0.0
      %1288 = vmatpush1.msra.mxu0 %v1245
      %1289 = vmatprep.subr.mxu0 0.0
      %1290 = vmatpush1.msra.mxu0 %v1275
      %1291 = vmatprep.subr.mxu0 0.0
      %1292 = vmatpush1.msra.mxu0 0.0
      %1293 = vmatprep.subr.mxu0 0.0
      %1294 = vmatpush1.msra.mxu0 0.0
      %1295 = vmatprep.subr.mxu0 0.0
      %1296 = vmatpush1.msra.mxu0 0.0
      %1297 = vmatprep.subr.mxu0 0.0
      %1298 = vmatpush1.msra.mxu0 0.0
      %1299 = vmatprep.subr.mxu0 0.0
      %1300 = vmatpush1.msra.mxu0 0.0
      %1301 = vmatprep.subr.mxu0 0.0
      %1302 = vmatpush1.msra.mxu0 0.0
      %1303 = vmatprep.subr.mxu0 0.0
      %1304 = vmatpush1.msra.mxu0 0.0
      %1305 = vmatprep.subr.mxu0 0.0
      %1306 = vmatpush1.msra.mxu0 0.0
      %1307 = vmatprep.subr.mxu0 0.0
      %1308 = vmatpush1.msra.mxu0 0.0
      %1309 = vmatprep.subr.mxu0 0.0
      %1310 = vmatpush1.msra.mxu0 0.0
      %1311 = vmatprep.subr.mxu0 0.0
      %1312 = vmatpush1.msra.mxu0 0.0
      %1313 = vmatprep.subr.mxu0 0.0
      %1314 = vmatpush1.msra.mxu0 0.0
      %1315 = vmatprep.subr.mxu0 0.0
      %1316 = vmatpush1.msra.mxu0 0.0
      %1317 = vmatprep.subr.mxu0 0.0
      %1318 = vmatpush1.msra.mxu0 0.0
      %1319 = vmatprep.subr.mxu0 0.0
      %1320 = vmatpush1.msra.mxu0 0.0
      %1321 = vmatprep.subr.mxu0 0.0
      %1322 = vmatpush1.msra.mxu0 0.0
      %1323 = vmatprep.subr.mxu0 0.0
      %1324 = vmatpush1.msra.mxu0 0.0
      %1325 = vmatprep.subr.mxu0 0.0
      %1326 = vmatpush1.msra.mxu0 0.0
      %1327 = vmatprep.subr.mxu0 0.0
      %1328 = vmatpush1.msra.mxu0 0.0
      %1329 = vmatprep.subr.mxu0 0.0
      %1330 = vmatpush1.msra.mxu0 0.0
      %1331 = vmatprep.subr.mxu0 0.0
      %1332 = vmatpush1.msra.mxu0 0.0
      %1333 = vmatprep.subr.mxu0 0.0
      %1334 = vmatpush1.msra.mxu0 0.0
      %1335 = vmatprep.subr.mxu0 0.0
      %1336 = vmatpush1.msra.mxu0 0.0
      %1337 = vmatprep.subr.mxu0 0.0
      %1338 = vmatpush1.msra.mxu0 0.0
      %1339 = vmatprep.subr.mxu0 0.0
      %1340 = vmatpush1.msra.mxu0 0.0
      %1341 = vmatprep.mubr.f32.mxu0 0.0
      %1342 = vmatmul.mubr.f32.gmra.mrb[0].mxu0 %v1269
      %v1343 = vpop.f32.mrb[0].mxu0
      %v1344 = vadd.f32 0.0, %v1343
      %v1345 = vpop.f32.mrb[0].mxu0
      %1346 = vmatprep.mubr.f32.mxu0 0.0
      %1347 = vmatmul.mubr.f32.gmra.mrb[0].mxu0 %v1272
      %v1348 = vpop.f32.mrb[0].mxu0
      %v1349 = vadd.f32 0.0, %v1348
      %v1350 = vpop.f32.mrb[0].mxu0
      %1351 = vdwg.mxu0
      %v1352 = vld [vmem:[%s9] sm:$0xff]
      %v1353 = vld [vmem:[%s9 + $0x8] sm:$0xff]
      %v1354 = vld [vmem:[%s9 + $0x10] sm:$0xff]
      %v1355 = vld [vmem:[%s9 + $0x18] sm:$0xff]
      %v1356 = vld [vmem:[%s9 + $0x20] sm:$0xff]
      %v1357 = vld [vmem:[%s9 + $0x28] sm:$0xff]
      %v1358 = vld [vmem:[%s9 + $0x30] sm:$0xff]
      %v1359 = vld [vmem:[%s9 + $0x38] sm:$0xff]
      %v1360 = vld [vmem:[%s10] sm:$0xff]
      %v1361 = vld [vmem:[%s10 + $0x8] sm:$0xff]
      %v1362 = vld [vmem:[%s10 + $0x10] sm:$0xff]
      %v1363 = vld [vmem:[%s10 + $0x18] sm:$0xff]
      %v1364 = vld [vmem:[%s11] sm:$0x3]
      %vm1365 = vcmask 130048
      %v1366 = vsel %vm1365, %v1344, 0.0
      %v1367 = vsel %vm1365, %v1349, 0.0
      %v1368 = vlaneseq
      %v1369 = vshrl.u32 %v1368, 7
      %v1370 = vsub.s32 0, %v1369
      %v1371 = vrot.slane %v1364, %v1370
      %1373 = vrot.lane.b32.xlu0 %v1371, 123
      %v1374 = vpop.permute.xlu0 %1373
      %v1376 = vmul.f32 %v1374, 0.0
      %v1377 = vmul.f32 %v1366, %v1374
      %v1378 = vmul.f32 %v1367, %v1374
      %v1379 = vlaneseq
      %v1380 = vshrl.u32 %v1379, 7
      %v1381 = vsub.s32 1, %v1380
      %v1382 = vrot.slane %v1364, %v1381
      %1384 = vrot.lane.b32.xlu0 %v1382, 125
      %v1385 = vpop.permute.xlu0 %1384
      %v1387 = vmul.f32 %v1385, 0.0
      %v1388 = vmul.f32 %v1366, %v1385
      %v1389 = vmul.f32 %v1367, %v1385
      %1390 = vrot.lane.b32.xlu0 %v1371, 127
      %v1391 = vpop.permute.xlu0 %1390
      %v1393 = vmul.f32 %v1391, 0.0
      %v1394 = vmul.f32 %v1366, %v1391
      %v1395 = vmul.f32 %v1367, %v1391
      %1396 = vrot.lane.b32.xlu0 %v1382, 1
      %v1397 = vpop.permute.xlu0 %1396
      %v1399 = vmul.f32 %v1366, %v1397
      %v1400 = vmul.f32 %v1367, %v1397
      %1401 = vrot.lane.b32.xlu0 %v1371, 3
      %v1402 = vpop.permute.xlu0 %1401
      %v1404 = vmul.f32 %v1366, %v1402
      %v1405 = vmul.f32 %v1367, %v1402
      %1406 = vrot.lane.b32.xlu0 %v1382, 5
      %v1407 = vpop.permute.xlu0 %1406
      %v1409 = vmul.f32 %v1366, %v1407
      %v1410 = vmul.f32 %v1367, %v1407
      %1413 = vrot.lane.b32.xlu0 %v1366, 127
      %v1414 = vpop.permute.xlu0 %1413
      %1415 = vrot.lane.b32.xlu0 %v1367, 127
      %v1416 = vpop.permute.xlu0 %1415
      %v1417 = vsel %vm596, %v644, %v1414
      %v1418 = vsel %vm596, %v644, %v1416
      %1422 = vrot.lane.b32.xlu0 %v1387, 126
      %v1423 = vpop.permute.xlu0 %1422
      %1424 = vrot.lane.b32.xlu0 %v1388, 126
      %v1425 = vpop.permute.xlu0 %1424
      %1426 = vrot.lane.b32.xlu0 %v1389, 126
      %v1427 = vpop.permute.xlu0 %1426
      %v1428 = vsel %vm660, %v1423, %v1425
      %v1429 = vsel %vm660, %v1423, %v1427
      %1433 = vrot.lane.b32.xlu0 %v1393, 124
      %v1434 = vpop.permute.xlu0 %1433
      %1435 = vrot.lane.b32.xlu0 %v1394, 124
      %v1436 = vpop.permute.xlu0 %1435
      %1437 = vrot.lane.b32.xlu0 %v1395, 124
      %v1438 = vpop.permute.xlu0 %1437
      %vm1439 = vcmask 1014784
      %v1440 = vsel %vm1439, %v1434, %v1436
      %v1441 = vsel %vm1439, %v1434, %v1438
      %1442 = vrot.lane.b32.xlu0 %v1366, 123
      %v1443 = vpop.permute.xlu0 %1442
      %1444 = vrot.lane.b32.xlu0 %v1367, 123
      %v1445 = vpop.permute.xlu0 %1444
      %1448 = vrot.lane.b32.xlu0 %v1399, 122
      %v1449 = vpop.permute.xlu0 %1448
      %1450 = vrot.lane.b32.xlu0 %v1400, 122
      %v1451 = vpop.permute.xlu0 %1450
      %1454 = vrot.lane.b32.xlu0 %v1404, 120
      %v1455 = vpop.permute.xlu0 %1454
      %1456 = vrot.lane.b32.xlu0 %v1405, 120
      %v1457 = vpop.permute.xlu0 %1456
      %1458 = vrot.lane.b32.xlu0 %v1366, 119
      %v1459 = vpop.permute.xlu0 %1458
      %1460 = vrot.lane.b32.xlu0 %v1367, 119
      %v1461 = vpop.permute.xlu0 %1460
      %1464 = vrot.lane.b32.xlu0 %v1409, 118
      %v1465 = vpop.permute.xlu0 %1464
      %1466 = vrot.lane.b32.xlu0 %v1410, 118
      %v1467 = vpop.permute.xlu0 %1466
      %1469 = vset.pattern.permute.xlu0 0
      %1470 = vperm.xlu0 %1469, %v1360
      %v1471 = vpop.permute.xlu0 %1470
      %1474 = vset.pattern.permute.xlu0 0
      %1475 = vperm.xlu0 %1474, %v1361
      %v1476 = vpop.permute.xlu0 %1475
      %1479 = vset.pattern.permute.xlu0 0
      %1480 = vperm.xlu0 %1479, %v1362
      %v1481 = vpop.permute.xlu0 %1480
      %1484 = vset.pattern.permute.xlu0 0
      %1485 = vperm.xlu0 %1484, %v1363
      %v1486 = vpop.permute.xlu0 %1485
      %1491 = vrot.lane.b32.xlu0 %v1376, 5
      %v1492 = vpop.permute.xlu0 %1491
      %1493 = vrot.lane.b32.xlu0 %v1377, 5
      %v1494 = vpop.permute.xlu0 %1493
      %1495 = vrot.lane.b32.xlu0 %v1378, 5
      %v1496 = vpop.permute.xlu0 %1495
      %1497 = vrot.lane.b32.xlu0 %v1417, 5
      %v1498 = vpop.permute.xlu0 %1497
      %1499 = vrot.lane.b32.xlu0 %v1414, 5
      %v1500 = vpop.permute.xlu0 %1499
      %1501 = vrot.lane.b32.xlu0 %v1418, 5
      %v1502 = vpop.permute.xlu0 %1501
      %1503 = vrot.lane.b32.xlu0 %v1416, 5
      %v1504 = vpop.permute.xlu0 %1503
      %1505 = vrot.lane.b32.xlu0 %v1428, 5
      %v1506 = vpop.permute.xlu0 %1505
      %1507 = vrot.lane.b32.xlu0 %v1425, 5
      %v1508 = vpop.permute.xlu0 %1507
      %1509 = vrot.lane.b32.xlu0 %v1429, 5
      %v1510 = vpop.permute.xlu0 %1509
      %1511 = vrot.lane.b32.xlu0 %v1427, 5
      %v1512 = vpop.permute.xlu0 %1511
      %1513 = vrot.lane.b32.xlu0 %v1440, 5
      %v1514 = vpop.permute.xlu0 %1513
      %1515 = vrot.lane.b32.xlu0 %v1436, 5
      %v1516 = vpop.permute.xlu0 %1515
      %1517 = vrot.lane.b32.xlu0 %v1441, 5
      %v1518 = vpop.permute.xlu0 %1517
      %1519 = vrot.lane.b32.xlu0 %v1438, 5
      %v1520 = vpop.permute.xlu0 %1519
      %1521 = vrot.lane.b32.xlu0 %v1443, 5
      %v1522 = vpop.permute.xlu0 %1521
      %1523 = vrot.lane.b32.xlu0 %v1445, 5
      %v1524 = vpop.permute.xlu0 %1523
      %1525 = vrot.lane.b32.xlu0 %v1449, 5
      %v1526 = vpop.permute.xlu0 %1525
      %1527 = vrot.lane.b32.xlu0 %v1451, 5
      %v1528 = vpop.permute.xlu0 %1527
      %1529 = vrot.lane.b32.xlu0 %v1455, 5
      %v1530 = vpop.permute.xlu0 %1529
      %1531 = vrot.lane.b32.xlu0 %v1457, 5
      %v1532 = vpop.permute.xlu0 %1531
      %1533 = vrot.lane.b32.xlu0 %v1459, 5
      %v1534 = vpop.permute.xlu0 %1533
      %1535 = vrot.lane.b32.xlu0 %v1461, 5
      %v1536 = vpop.permute.xlu0 %1535
      %1537 = vrot.lane.b32.xlu0 %v1465, 5
      %v1538 = vpop.permute.xlu0 %1537
      %1539 = vrot.lane.b32.xlu0 %v1467, 5
      %v1540 = vpop.permute.xlu0 %1539
      %vm1541 = vcmask 39936
      %v1542 = vsel %vm1541, %v1492, %v1494
      %v1543 = vsel %vm1541, %v1492, %v1496
      %v1544 = vsel %vm1541, %v1498, %v1500
      %v1545 = vsel %vm1541, %v1502, %v1504
      %v1546 = vsel %vm1541, %v1506, %v1508
      %v1547 = vsel %vm1541, %v1510, %v1512
      %v1548 = vsel %vm1541, %v1514, %v1516
      %v1549 = vsel %vm1541, %v1518, %v1520
      %v1569 = vsel %vm1365, %v1353, 0
      %v1572 = vsel %vm1365, %v1355, 0
      %v1575 = vsel %vm1365, %v1357, 0
      %v1578 = vsel %vm1365, %v1359, 0
      %1580 = vmatprep.subr.mxu0 0.0
      %1581 = vmatpush1.msra.mxu0 %v1542
      %1582 = vmatprep.subr.mxu0 0.0
      %1583 = vmatpush1.msra.mxu0 %v1543
      %1584 = vmatprep.subr.mxu0 0.0
      %1585 = vmatpush1.msra.mxu0 %v1544
      %1586 = vmatprep.subr.mxu0 0.0
      %1587 = vmatpush1.msra.mxu0 %v1545
      %1588 = vmatprep.subr.mxu0 0.0
      %1589 = vmatpush1.msra.mxu0 %v1546
      %1590 = vmatprep.subr.mxu0 0.0
      %1591 = vmatpush1.msra.mxu0 %v1547
      %1592 = vmatprep.subr.mxu0 0.0
      %1593 = vmatpush1.msra.mxu0 %v1548
      %1594 = vmatprep.subr.mxu0 0.0
      %1595 = vmatpush1.msra.mxu0 %v1549
      %1596 = vmatprep.subr.mxu0 0.0
      %1597 = vmatpush1.msra.mxu0 %v1522
      %1598 = vmatprep.subr.mxu0 0.0
      %1599 = vmatpush1.msra.mxu0 %v1524
      %1600 = vmatprep.subr.mxu0 0.0
      %1601 = vmatpush1.msra.mxu0 %v1526
      %1602 = vmatprep.subr.mxu0 0.0
      %1603 = vmatpush1.msra.mxu0 %v1528
      %1604 = vmatprep.subr.mxu0 0.0
      %1605 = vmatpush1.msra.mxu0 %v1530
      %1606 = vmatprep.subr.mxu0 0.0
      %1607 = vmatpush1.msra.mxu0 %v1532
      %1608 = vmatprep.subr.mxu0 0.0
      %1609 = vmatpush1.msra.mxu0 %v1534
      %1610 = vmatprep.subr.mxu0 0.0
      %1611 = vmatpush1.msra.mxu0 %v1536
      %1612 = vmatprep.subr.mxu0 0.0
      %1613 = vmatpush1.msra.mxu0 %v1538
      %1614 = vmatprep.subr.mxu0 0.0
      %1615 = vmatpush1.msra.mxu0 %v1540
      %1616 = vmatprep.subr.mxu0 0.0
      %1617 = vmatpush1.msra.mxu0 0.0
      %1618 = vmatprep.subr.mxu0 0.0
      %1619 = vmatpush1.msra.mxu0 0.0
      %1620 = vmatprep.subr.mxu0 0.0
      %1621 = vmatpush1.msra.mxu0 0.0
      %1622 = vmatprep.subr.mxu0 0.0
      %1623 = vmatpush1.msra.mxu0 0.0
      %1624 = vmatprep.subr.mxu0 0.0
      %1625 = vmatpush1.msra.mxu0 0.0
      %1626 = vmatprep.subr.mxu0 0.0
      %1627 = vmatpush1.msra.mxu0 0.0
      %1628 = vmatprep.subr.mxu0 0.0
      %1629 = vmatpush1.msra.mxu0 0.0
      %1630 = vmatprep.subr.mxu0 0.0
      %1631 = vmatpush1.msra.mxu0 0.0
      %1632 = vmatprep.subr.mxu0 0.0
      %1633 = vmatpush1.msra.mxu0 0.0
      %1634 = vmatprep.subr.mxu0 0.0
      %1635 = vmatpush1.msra.mxu0 0.0
      %1636 = vmatprep.subr.mxu0 0.0
      %1637 = vmatpush1.msra.mxu0 0.0
      %1638 = vmatprep.subr.mxu0 0.0
      %1639 = vmatpush1.msra.mxu0 0.0
      %1640 = vmatprep.subr.mxu0 0.0
      %1641 = vmatpush1.msra.mxu0 0.0
      %1642 = vmatprep.subr.mxu0 0.0
      %1643 = vmatpush1.msra.mxu0 0.0
      %1644 = vmatprep.mubr.f32.mxu0 %v1569
      %1645 = vmatmul.mubr.f32.gmra.mrb[0].mxu0 %v1352
      %v1646 = vpop.f32.mrb[0].mxu0
      %v1647 = vadd.f32 %v1471, %v1646
      %v1648 = vpop.f32.mrb[0].mxu0
      %1649 = vmatprep.mubr.f32.mxu0 %v1572
      %1650 = vmatmul.mubr.f32.gmra.mrb[0].mxu0 %v1354
      %v1651 = vpop.f32.mrb[0].mxu0
      %v1652 = vadd.f32 %v1476, %v1651
      %v1653 = vpop.f32.mrb[0].mxu0
      %1654 = vmatprep.mubr.f32.mxu0 %v1575
      %1655 = vmatmul.mubr.f32.gmra.mrb[0].mxu0 %v1356
      %v1656 = vpop.f32.mrb[0].mxu0
      %v1657 = vadd.f32 %v1481, %v1656
      %v1658 = vpop.f32.mrb[0].mxu0
      %1659 = vmatprep.mubr.f32.mxu0 %v1578
      %1660 = vmatmul.mubr.f32.gmra.mrb[0].mxu0 %v1358
      %v1661 = vpop.f32.mrb[0].mxu0
      %v1662 = vadd.f32 %v1486, %v1661
      %v1663 = vpop.f32.mrb[0].mxu0
      %1664 = vdwg.mxu0
      %v1665 = vmax.f32 %v1647, 0.0
      %v1666 = vmax.f32 %v1652, 0.0
      %v1667 = vmax.f32 %v1657, 0.0
      %v1668 = vmax.f32 %v1662, 0.0
      %v1669 = vld [vmem:[%s12] sm:$0xff]
      %v1670 = vld [vmem:[%s12 + $0x8] sm:$0xff]
      %v1671 = vld [vmem:[%s12 + $0x10] sm:$0xff]
      %v1672 = vld [vmem:[%s12 + $0x18] sm:$0xff]
      %v1673 = vld [vmem:[%s12 + $0x20] sm:$0xff]
      %v1674 = vld [vmem:[%s12 + $0x28] sm:$0xff]
      %v1675 = vld [vmem:[%s12 + $0x30] sm:$0xff]
      %v1676 = vld [vmem:[%s12 + $0x38] sm:$0xff]
      %v1677 = vld [vmem:[%s12 + $0x40] sm:$0xff]
      %v1678 = vld [vmem:[%s12 + $0x48] sm:$0xff]
      %v1679 = vld [vmem:[%s12 + $0x50] sm:$0xff]
      %v1680 = vld [vmem:[%s12 + $0x58] sm:$0xff]
      %v1681 = vld [vmem:[%s13] sm:$0xff]
      %v1682 = vld [vmem:[%s13 + $0x8] sm:$0xff]
      %v1683 = vld [vmem:[%s13 + $0x10] sm:$0xff]
      %v1684 = vld [vmem:[%s13 + $0x18] sm:$0xff]
      %v1685 = vld [vmem:[%s14] sm:$0x3]
      %v1686 = vsel %vm1365, %v1665, 0.0
      %v1687 = vsel %vm1365, %v1666, 0.0
      %v1688 = vsel %vm1365, %v1667, 0.0
      %v1689 = vsel %vm1365, %v1668, 0.0
      %v1690 = vlaneseq
      %v1691 = vshrl.u32 %v1690, 7
      %v1692 = vsub.s32 0, %v1691
      %v1693 = vrot.slane %v1685, %v1692
      %1695 = vrot.lane.b32.xlu0 %v1693, 123
      %v1696 = vpop.permute.xlu0 %1695
      %v1698 = vmul.f32 %v1696, 0.0
      %v1699 = vmul.f32 %v1686, %v1696
      %v1700 = vmul.f32 %v1687, %v1696
      %v1701 = vmul.f32 %v1688, %v1696
      %v1702 = vmul.f32 %v1689, %v1696
      %v1703 = vlaneseq
      %v1704 = vshrl.u32 %v1703, 7
      %v1705 = vsub.s32 1, %v1704
      %v1706 = vrot.slane %v1685, %v1705
      %1708 = vrot.lane.b32.xlu0 %v1706, 125
      %v1709 = vpop.permute.xlu0 %1708
      %v1711 = vmul.f32 %v1709, 0.0
      %v1712 = vmul.f32 %v1686, %v1709
      %v1713 = vmul.f32 %v1687, %v1709
      %v1714 = vmul.f32 %v1688, %v1709
      %v1715 = vmul.f32 %v1689, %v1709
      %1716 = vrot.lane.b32.xlu0 %v1693, 127
      %v1717 = vpop.permute.xlu0 %1716
      %v1719 = vmul.f32 %v1717, 0.0
      %v1720 = vmul.f32 %v1686, %v1717
      %v1721 = vmul.f32 %v1687, %v1717
      %v1722 = vmul.f32 %v1688, %v1717
      %v1723 = vmul.f32 %v1689, %v1717
      %1724 = vrot.lane.b32.xlu0 %v1706, 1
      %v1725 = vpop.permute.xlu0 %1724
      %v1727 = vmul.f32 %v1686, %v1725
      %v1728 = vmul.f32 %v1687, %v1725
      %v1729 = vmul.f32 %v1688, %v1725
      %v1730 = vmul.f32 %v1689, %v1725
      %1731 = vrot.lane.b32.xlu0 %v1693, 3
      %v1732 = vpop.permute.xlu0 %1731
      %v1734 = vmul.f32 %v1686, %v1732
      %v1735 = vmul.f32 %v1687, %v1732
      %v1736 = vmul.f32 %v1688, %v1732
      %v1737 = vmul.f32 %v1689, %v1732
      %1738 = vrot.lane.b32.xlu0 %v1706, 5
      %v1739 = vpop.permute.xlu0 %1738
      %v1741 = vmul.f32 %v1686, %v1739
      %v1742 = vmul.f32 %v1687, %v1739
      %v1743 = vmul.f32 %v1688, %v1739
      %v1744 = vmul.f32 %v1689, %v1739
      %1749 = vrot.lane.b32.xlu0 %v1686, 127
      %v1750 = vpop.permute.xlu0 %1749
      %1751 = vrot.lane.b32.xlu0 %v1687, 127
      %v1752 = vpop.permute.xlu0 %1751
      %1753 = vrot.lane.b32.xlu0 %v1688, 127
      %v1754 = vpop.permute.xlu0 %1753
      %1755 = vrot.lane.b32.xlu0 %v1689, 127
      %v1756 = vpop.permute.xlu0 %1755
      %v1757 = vsel %vm596, %v644, %v1750
      %v1758 = vsel %vm596, %v644, %v1752
      %v1759 = vsel %vm596, %v644, %v1754
      %v1760 = vsel %vm596, %v644, %v1756
      %1766 = vrot.lane.b32.xlu0 %v1711, 126
      %v1767 = vpop.permute.xlu0 %1766
      %1768 = vrot.lane.b32.xlu0 %v1712, 126
      %v1769 = vpop.permute.xlu0 %1768
      %1770 = vrot.lane.b32.xlu0 %v1713, 126
      %v1771 = vpop.permute.xlu0 %1770
      %1772 = vrot.lane.b32.xlu0 %v1714, 126
      %v1773 = vpop.permute.xlu0 %1772
      %1774 = vrot.lane.b32.xlu0 %v1715, 126
      %v1775 = vpop.permute.xlu0 %1774
      %v1776 = vsel %vm660, %v1767, %v1769
      %v1777 = vsel %vm660, %v1767, %v1771
      %v1778 = vsel %vm660, %v1767, %v1773
      %v1779 = vsel %vm660, %v1767, %v1775
      %1785 = vrot.lane.b32.xlu0 %v1719, 124
      %v1786 = vpop.permute.xlu0 %1785
      %1787 = vrot.lane.b32.xlu0 %v1720, 124
      %v1788 = vpop.permute.xlu0 %1787
      %1789 = vrot.lane.b32.xlu0 %v1721, 124
      %v1790 = vpop.permute.xlu0 %1789
      %1791 = vrot.lane.b32.xlu0 %v1722, 124
      %v1792 = vpop.permute.xlu0 %1791
      %1793 = vrot.lane.b32.xlu0 %v1723, 124
      %v1794 = vpop.permute.xlu0 %1793
      %v1795 = vsel %vm1439, %v1786, %v1788
      %v1796 = vsel %vm1439, %v1786, %v1790
      %v1797 = vsel %vm1439, %v1786, %v1792
      %v1798 = vsel %vm1439, %v1786, %v1794
      %1799 = vrot.lane.b32.xlu0 %v1686, 123
      %v1800 = vpop.permute.xlu0 %1799
      %1801 = vrot.lane.b32.xlu0 %v1687, 123
      %v1802 = vpop.permute.xlu0 %1801
      %1803 = vrot.lane.b32.xlu0 %v1688, 123
      %v1804 = vpop.permute.xlu0 %1803
      %1805 = vrot.lane.b32.xlu0 %v1689, 123
      %v1806 = vpop.permute.xlu0 %1805
      %1811 = vrot.lane.b32.xlu0 %v1727, 122
      %v1812 = vpop.permute.xlu0 %1811
      %1813 = vrot.lane.b32.xlu0 %v1728, 122
      %v1814 = vpop.permute.xlu0 %1813
      %1815 = vrot.lane.b32.xlu0 %v1729, 122
      %v1816 = vpop.permute.xlu0 %1815
      %1817 = vrot.lane.b32.xlu0 %v1730, 122
      %v1818 = vpop.permute.xlu0 %1817
      %1823 = vrot.lane.b32.xlu0 %v1734, 120
      %v1824 = vpop.permute.xlu0 %1823
      %1825 = vrot.lane.b32.xlu0 %v1735, 120
      %v1826 = vpop.permute.xlu0 %1825
      %1827 = vrot.lane.b32.xlu0 %v1736, 120
      %v1828 = vpop.permute.xlu0 %1827
      %1829 = vrot.lane.b32.xlu0 %v1737, 120
      %v1830 = vpop.permute.xlu0 %1829
      %1831 = vrot.lane.b32.xlu0 %v1686, 119
      %v1832 = vpop.permute.xlu0 %1831
      %1833 = vrot.lane.b32.xlu0 %v1687, 119
      %v1834 = vpop.permute.xlu0 %1833
      %1835 = vrot.lane.b32.xlu0 %v1688, 119
      %v1836 = vpop.permute.xlu0 %1835
      %1837 = vrot.lane.b32.xlu0 %v1689, 119
      %v1838 = vpop.permute.xlu0 %1837
      %1843 = vrot.lane.b32.xlu0 %v1741, 118
      %v1844 = vpop.permute.xlu0 %1843
      %1845 = vrot.lane.b32.xlu0 %v1742, 118
      %v1846 = vpop.permute.xlu0 %1845
      %1847 = vrot.lane.b32.xlu0 %v1743, 118
      %v1848 = vpop.permute.xlu0 %1847
      %1849 = vrot.lane.b32.xlu0 %v1744, 118
      %v1850 = vpop.permute.xlu0 %1849
      %1852 = vset.pattern.permute.xlu0 0
      %1853 = vperm.xlu0 %1852, %v1681
      %v1854 = vpop.permute.xlu0 %1853
      %1857 = vset.pattern.permute.xlu0 0
      %1858 = vperm.xlu0 %1857, %v1682
      %v1859 = vpop.permute.xlu0 %1858
      %1862 = vset.pattern.permute.xlu0 0
      %1863 = vperm.xlu0 %1862, %v1683
      %v1864 = vpop.permute.xlu0 %1863
      %1867 = vset.pattern.permute.xlu0 0
      %1868 = vperm.xlu0 %1867, %v1684
      %v1869 = vpop.permute.xlu0 %1868
      %1876 = vrot.lane.b32.xlu0 %v1698, 5
      %v1877 = vpop.permute.xlu0 %1876
      %1878 = vrot.lane.b32.xlu0 %v1699, 5
      %v1879 = vpop.permute.xlu0 %1878
      %1880 = vrot.lane.b32.xlu0 %v1700, 5
      %v1881 = vpop.permute.xlu0 %1880
      %1882 = vrot.lane.b32.xlu0 %v1701, 5
      %v1883 = vpop.permute.xlu0 %1882
      %1884 = vrot.lane.b32.xlu0 %v1702, 5
      %v1885 = vpop.permute.xlu0 %1884
      %1886 = vrot.lane.b32.xlu0 %v1757, 5
      %v1887 = vpop.permute.xlu0 %1886
      %1888 = vrot.lane.b32.xlu0 %v1750, 5
      %v1889 = vpop.permute.xlu0 %1888
      %1890 = vrot.lane.b32.xlu0 %v1758, 5
      %v1891 = vpop.permute.xlu0 %1890
      %1892 = vrot.lane.b32.xlu0 %v1752, 5
      %v1893 = vpop.permute.xlu0 %1892
      %1894 = vrot.lane.b32.xlu0 %v1759, 5
      %v1895 = vpop.permute.xlu0 %1894
      %1896 = vrot.lane.b32.xlu0 %v1754, 5
      %v1897 = vpop.permute.xlu0 %1896
      %1898 = vrot.lane.b32.xlu0 %v1760, 5
      %v1899 = vpop.permute.xlu0 %1898
      %1900 = vrot.lane.b32.xlu0 %v1756, 5
      %v1901 = vpop.permute.xlu0 %1900
      %1902 = vrot.lane.b32.xlu0 %v1776, 5
      %v1903 = vpop.permute.xlu0 %1902
      %1904 = vrot.lane.b32.xlu0 %v1769, 5
      %v1905 = vpop.permute.xlu0 %1904
      %1906 = vrot.lane.b32.xlu0 %v1777, 5
      %v1907 = vpop.permute.xlu0 %1906
      %1908 = vrot.lane.b32.xlu0 %v1771, 5
      %v1909 = vpop.permute.xlu0 %1908
      %1910 = vrot.lane.b32.xlu0 %v1778, 5
      %v1911 = vpop.permute.xlu0 %1910
      %1912 = vrot.lane.b32.xlu0 %v1773, 5
      %v1913 = vpop.permute.xlu0 %1912
      %1914 = vrot.lane.b32.xlu0 %v1779, 5
      %v1915 = vpop.permute.xlu0 %1914
      %1916 = vrot.lane.b32.xlu0 %v1775, 5
      %v1917 = vpop.permute.xlu0 %1916
      %1918 = vrot.lane.b32.xlu0 %v1795, 5
      %v1919 = vpop.permute.xlu0 %1918
      %1920 = vrot.lane.b32.xlu0 %v1788, 5
      %v1921 = vpop.permute.xlu0 %1920
      %1922 = vrot.lane.b32.xlu0 %v1796, 5
      %v1923 = vpop.permute.xlu0 %1922
      %1924 = vrot.lane.b32.xlu0 %v1790, 5
      %v1925 = vpop.permute.xlu0 %1924
      %1926 = vrot.lane.b32.xlu0 %v1797, 5
      %v1927 = vpop.permute.xlu0 %1926
      %1928 = vrot.lane.b32.xlu0 %v1792, 5
      %v1929 = vpop.permute.xlu0 %1928
      %1930 = vrot.lane.b32.xlu0 %v1798, 5
      %v1931 = vpop.permute.xlu0 %1930
      %1932 = vrot.lane.b32.xlu0 %v1794, 5
      %v1933 = vpop.permute.xlu0 %1932
      %1934 = vrot.lane.b32.xlu0 %v1800, 5
      %v1935 = vpop.permute.xlu0 %1934
      %1936 = vrot.lane.b32.xlu0 %v1802, 5
      %v1937 = vpop.permute.xlu0 %1936
      %1938 = vrot.lane.b32.xlu0 %v1804, 5
      %v1939 = vpop.permute.xlu0 %1938
      %1940 = vrot.lane.b32.xlu0 %v1806, 5
      %v1941 = vpop.permute.xlu0 %1940
      %1942 = vrot.lane.b32.xlu0 %v1812, 5
      %v1943 = vpop.permute.xlu0 %1942
      %1944 = vrot.lane.b32.xlu0 %v1814, 5
      %v1945 = vpop.permute.xlu0 %1944
      %1946 = vrot.lane.b32.xlu0 %v1816, 5
      %v1947 = vpop.permute.xlu0 %1946
      %1948 = vrot.lane.b32.xlu0 %v1818, 5
      %v1949 = vpop.permute.xlu0 %1948
      %1950 = vrot.lane.b32.xlu0 %v1824, 5
      %v1951 = vpop.permute.xlu0 %1950
      %1952 = vrot.lane.b32.xlu0 %v1826, 5
      %v1953 = vpop.permute.xlu0 %1952
      %1954 = vrot.lane.b32.xlu0 %v1828, 5
      %v1955 = vpop.permute.xlu0 %1954
      %1956 = vrot.lane.b32.xlu0 %v1830, 5
      %v1957 = vpop.permute.xlu0 %1956
      %1958 = vrot.lane.b32.xlu0 %v1832, 5
      %v1959 = vpop.permute.xlu0 %1958
      %1960 = vrot.lane.b32.xlu0 %v1834, 5
      %v1961 = vpop.permute.xlu0 %1960
      %1962 = vrot.lane.b32.xlu0 %v1836, 5
      %v1963 = vpop.permute.xlu0 %1962
      %1964 = vrot.lane.b32.xlu0 %v1838, 5
      %v1965 = vpop.permute.xlu0 %1964
      %1966 = vrot.lane.b32.xlu0 %v1844, 5
      %v1967 = vpop.permute.xlu0 %1966
      %1968 = vrot.lane.b32.xlu0 %v1846, 5
      %v1969 = vpop.permute.xlu0 %1968
      %1970 = vrot.lane.b32.xlu0 %v1848, 5
      %v1971 = vpop.permute.xlu0 %1970
      %1972 = vrot.lane.b32.xlu0 %v1850, 5
      %v1973 = vpop.permute.xlu0 %1972
      %v1974 = vsel %vm1541, %v1877, %v1879
      %v1975 = vsel %vm1541, %v1877, %v1881
      %v1976 = vsel %vm1541, %v1877, %v1883
      %v1977 = vsel %vm1541, %v1877, %v1885
      %v1978 = vsel %vm1541, %v1887, %v1889
      %v1979 = vsel %vm1541, %v1891, %v1893
      %v1980 = vsel %vm1541, %v1895, %v1897
      %v1981 = vsel %vm1541, %v1899, %v1901
      %v1982 = vsel %vm1541, %v1903, %v1905
      %v1983 = vsel %vm1541, %v1907, %v1909
      %v1984 = vsel %vm1541, %v1911, %v1913
      %v1985 = vsel %vm1541, %v1915, %v1917
      %v1986 = vsel %vm1541, %v1919, %v1921
      %v1987 = vsel %vm1541, %v1923, %v1925
      %v1988 = vsel %vm1541, %v1927, %v1929
      %v1989 = vsel %vm1541, %v1931, %v1933
      %vm2026 = vcmask 261120
      %v2028 = vsel %vm2026, %v1671, 0
      %v2031 = vsel %vm2026, %v1674, 0
      %v2034 = vsel %vm2026, %v1677, 0
      %v2037 = vsel %vm2026, %v1680, 0
      %2039 = vmatprep.subr.mxu0 0.0
      %2040 = vmatpush1.msra.mxu0 %v1974
      %2041 = vmatprep.subr.mxu0 0.0
      %2042 = vmatpush1.msra.mxu0 %v1975
      %2043 = vmatprep.subr.mxu0 0.0
      %2044 = vmatpush1.msra.mxu0 %v1976
      %2045 = vmatprep.subr.mxu0 0.0
      %2046 = vmatpush1.msra.mxu0 %v1977
      %2047 = vmatprep.subr.mxu0 0.0
      %2048 = vmatpush1.msra.mxu0 %v1978
      %2049 = vmatprep.subr.mxu0 0.0
      %2050 = vmatpush1.msra.mxu0 %v1979
      %2051 = vmatprep.subr.mxu0 0.0
      %2052 = vmatpush1.msra.mxu0 %v1980
      %2053 = vmatprep.subr.mxu0 0.0
      %2054 = vmatpush1.msra.mxu0 %v1981
      %2055 = vmatprep.subr.mxu0 0.0
      %2056 = vmatpush1.msra.mxu0 %v1982
      %2057 = vmatprep.subr.mxu0 0.0
      %2058 = vmatpush1.msra.mxu0 %v1983
      %2059 = vmatprep.subr.mxu0 0.0
      %2060 = vmatpush1.msra.mxu0 %v1984
      %2061 = vmatprep.subr.mxu0 0.0
      %2062 = vmatpush1.msra.mxu0 %v1985
      %2063 = vmatprep.subr.mxu0 0.0
      %2064 = vmatpush1.msra.mxu0 %v1986
      %2065 = vmatprep.subr.mxu0 0.0
      %2066 = vmatpush1.msra.mxu0 %v1987
      %2067 = vmatprep.subr.mxu0 0.0
      %2068 = vmatpush1.msra.mxu0 %v1988
      %2069 = vmatprep.subr.mxu0 0.0
      %2070 = vmatpush1.msra.mxu0 %v1989
      %2071 = vmatprep.subr.mxu0 0.0
      %2072 = vmatpush1.msra.mxu0 %v1935
      %2073 = vmatprep.subr.mxu0 0.0
      %2074 = vmatpush1.msra.mxu0 %v1937
      %2075 = vmatprep.subr.mxu0 0.0
      %2076 = vmatpush1.msra.mxu0 %v1939
      %2077 = vmatprep.subr.mxu0 0.0
      %2078 = vmatpush1.msra.mxu0 %v1941
      %2079 = vmatprep.subr.mxu0 0.0
      %2080 = vmatpush1.msra.mxu0 %v1943
      %2081 = vmatprep.subr.mxu0 0.0
      %2082 = vmatpush1.msra.mxu0 %v1945
      %2083 = vmatprep.subr.mxu0 0.0
      %2084 = vmatpush1.msra.mxu0 %v1947
      %2085 = vmatprep.subr.mxu0 0.0
      %2086 = vmatpush1.msra.mxu0 %v1949
      %2087 = vmatprep.subr.mxu0 0.0
      %2088 = vmatpush1.msra.mxu0 %v1951
      %2089 = vmatprep.subr.mxu0 0.0
      %2090 = vmatpush1.msra.mxu0 %v1953
      %2091 = vmatprep.subr.mxu0 0.0
      %2092 = vmatpush1.msra.mxu0 %v1955
      %2093 = vmatprep.subr.mxu0 0.0
      %2094 = vmatpush1.msra.mxu0 %v1957
      %2095 = vmatprep.subr.mxu0 0.0
      %2096 = vmatpush1.msra.mxu0 %v1959
      %2097 = vmatprep.subr.mxu0 0.0
      %2098 = vmatpush1.msra.mxu0 %v1961
      %2099 = vmatprep.subr.mxu0 0.0
      %2100 = vmatpush1.msra.mxu0 %v1963
      %2101 = vmatprep.subr.mxu0 0.0
      %2102 = vmatpush1.msra.mxu0 %v1965
      %2103 = vmatprep.mubr.f32.mxu0 %v1670
      %2104 = vmatmul.mubr.f32.gmra.mrb[0].mxu0 %v1669
      %v2105 = vpop.f32.mrb[0].mxu0
      %v2106 = vadd.f32 %v1854, %v2105
      %v2107 = vpop.f32.mrb[0].mxu0
      %2108 = vmatprep.mubr.f32.mxu0 %v1673
      %2109 = vmatmul.mubr.f32.gmra.mrb[0].mxu0 %v1672
      %v2110 = vpop.f32.mrb[0].mxu0
      %v2111 = vadd.f32 %v1859, %v2110
      %v2112 = vpop.f32.mrb[0].mxu0
      %2113 = vmatprep.mubr.f32.mxu0 %v1676
      %2114 = vmatmul.mubr.f32.gmra.mrb[0].mxu0 %v1675
      %v2115 = vpop.f32.mrb[0].mxu0
      %v2116 = vadd.f32 %v1864, %v2115
      %v2117 = vpop.f32.mrb[0].mxu0
      %2118 = vmatprep.mubr.f32.mxu0 %v1679
      %2119 = vmatmul.mubr.f32.gmra.mrb[0].mxu0 %v1678
      %v2120 = vpop.f32.mrb[0].mxu0
      %v2121 = vadd.f32 %v1869, %v2120
      %v2122 = vpop.f32.mrb[0].mxu0
      %2123 = vdwg.mxu0
      %2124 = vmatprep.subr.mxu0 0.0
      %2125 = vmatpush1.msra.mxu0 %v1967
      %2126 = vmatprep.subr.mxu0 0.0
      %2127 = vmatpush1.msra.mxu0 %v1969
      %2128 = vmatprep.subr.mxu0 0.0
      %2129 = vmatpush1.msra.mxu0 %v1971
      %2130 = vmatprep.subr.mxu0 0.0
      %2131 = vmatpush1.msra.mxu0 %v1973
      %2132 = vmatprep.subr.mxu0 0.0
      %2133 = vmatpush1.msra.mxu0 0.0
      %2134 = vmatprep.subr.mxu0 0.0
      %2135 = vmatpush1.msra.mxu0 0.0
      %2136 = vmatprep.subr.mxu0 0.0
      %2137 = vmatpush1.msra.mxu0 0.0
      %2138 = vmatprep.subr.mxu0 0.0
      %2139 = vmatpush1.msra.mxu0 0.0
      %2140 = vmatprep.subr.mxu0 0.0
      %2141 = vmatpush1.msra.mxu0 0.0
      %2142 = vmatprep.subr.mxu0 0.0
      %2143 = vmatpush1.msra.mxu0 0.0
      %2144 = vmatprep.subr.mxu0 0.0
      %2145 = vmatpush1.msra.mxu0 0.0
      %2146 = vmatprep.subr.mxu0 0.0
      %2147 = vmatpush1.msra.mxu0 0.0
      %2148 = vmatprep.subr.mxu0 0.0
      %2149 = vmatpush1.msra.mxu0 0.0
      %2150 = vmatprep.subr.mxu0 0.0
      %2151 = vmatpush1.msra.mxu0 0.0
      %2152 = vmatprep.subr.mxu0 0.0
      %2153 = vmatpush1.msra.mxu0 0.0
      %2154 = vmatprep.subr.mxu0 0.0
      %2155 = vmatpush1.msra.mxu0 0.0
      %2156 = vmatprep.subr.mxu0 0.0
      %2157 = vmatpush1.msra.mxu0 0.0
      %2158 = vmatprep.subr.mxu0 0.0
      %2159 = vmatpush1.msra.mxu0 0.0
      %2160 = vmatprep.subr.mxu0 0.0
      %2161 = vmatpush1.msra.mxu0 0.0
      %2162 = vmatprep.subr.mxu0 0.0
      %2163 = vmatpush1.msra.mxu0 0.0
      %2164 = vmatprep.subr.mxu0 0.0
      %2165 = vmatpush1.msra.mxu0 0.0
      %2166 = vmatprep.subr.mxu0 0.0
      %2167 = vmatpush1.msra.mxu0 0.0
      %2168 = vmatprep.subr.mxu0 0.0
      %2169 = vmatpush1.msra.mxu0 0.0
      %2170 = vmatprep.subr.mxu0 0.0
      %2171 = vmatpush1.msra.mxu0 0.0
      %2172 = vmatprep.subr.mxu0 0.0
      %2173 = vmatpush1.msra.mxu0 0.0
      %2174 = vmatprep.subr.mxu0 0.0
      %2175 = vmatpush1.msra.mxu0 0.0
      %2176 = vmatprep.subr.mxu0 0.0
      %2177 = vmatpush1.msra.mxu0 0.0
      %2178 = vmatprep.subr.mxu0 0.0
      %2179 = vmatpush1.msra.mxu0 0.0
      %2180 = vmatprep.subr.mxu0 0.0
      %2181 = vmatpush1.msra.mxu0 0.0
      %2182 = vmatprep.subr.mxu0 0.0
      %2183 = vmatpush1.msra.mxu0 0.0
      %2184 = vmatprep.subr.mxu0 0.0
      %2185 = vmatpush1.msra.mxu0 0.0
      %2186 = vmatprep.subr.mxu0 0.0
      %2187 = vmatpush1.msra.mxu0 0.0
      %2188 = vmatprep.mubr.f32.mxu0 0.0
      %2189 = vmatmul.mubr.f32.gmra.mrb[0].mxu0 %v2028
      %v2190 = vpop.f32.mrb[0].mxu0
      %v2191 = vadd.f32 %v2106, %v2190
      %v2192 = vpop.f32.mrb[0].mxu0
      %2193 = vmatprep.mubr.f32.mxu0 0.0
      %2194 = vmatmul.mubr.f32.gmra.mrb[0].mxu0 %v2031
      %v2195 = vpop.f32.mrb[0].mxu0
      %v2196 = vadd.f32 %v2111, %v2195
      %v2197 = vpop.f32.mrb[0].mxu0
      %2198 = vmatprep.mubr.f32.mxu0 0.0
      %2199 = vmatmul.mubr.f32.gmra.mrb[0].mxu0 %v2034
      %v2200 = vpop.f32.mrb[0].mxu0
      %v2201 = vadd.f32 %v2116, %v2200
      %v2202 = vpop.f32.mrb[0].mxu0
      %2203 = vmatprep.mubr.f32.mxu0 0.0
      %2204 = vmatmul.mubr.f32.gmra.mrb[0].mxu0 %v2037
      %v2205 = vpop.f32.mrb[0].mxu0
      %v2206 = vadd.f32 %v2121, %v2205
      %v2207 = vpop.f32.mrb[0].mxu0
      %2208 = vdwg.mxu0
      %v2209 = vmax.f32 %v2191, 0.0
      %v2210 = vmax.f32 %v2196, 0.0
      %v2211 = vmax.f32 %v2201, 0.0
      %v2212 = vmax.f32 %v2206, 0.0
      %v2213 = vld [vmem:[%s15] sm:$0xff]
      %v2214 = vld [vmem:[%s15 + $0x8] sm:$0x7]
      %2219 = vrot.lane.b32.xlu0 %v2209, 127
      %v2220 = vpop.permute.xlu0 %2219
      %2221 = vrot.lane.b32.xlu0 %v2210, 127
      %v2222 = vpop.permute.xlu0 %2221
      %2223 = vrot.lane.b32.xlu0 %v2211, 127
      %v2224 = vpop.permute.xlu0 %2223
      %2225 = vrot.lane.b32.xlu0 %v2212, 127
      %v2226 = vpop.permute.xlu0 %2225
      %v2231 = vmax.f32 %v2209, %v2220
      %v2232 = vmax.f32 %v2210, %v2222
      %v2233 = vmax.f32 %v2211, %v2224
      %v2234 = vmax.f32 %v2212, %v2226
      %2239 = vrot.lane.b32.xlu0 %v2231, 124
      %v2240 = vpop.permute.xlu0 %2239
      %2241 = vrot.lane.b32.xlu0 %v2232, 124
      %v2242 = vpop.permute.xlu0 %2241
      %2243 = vrot.lane.b32.xlu0 %v2233, 124
      %v2244 = vpop.permute.xlu0 %2243
      %2245 = vrot.lane.b32.xlu0 %v2234, 124
      %v2246 = vpop.permute.xlu0 %2245
      %v2251 = vmax.f32 %v2231, %v2240
      %v2252 = vmax.f32 %v2232, %v2242
      %v2253 = vmax.f32 %v2233, %v2244
      %v2254 = vmax.f32 %v2234, %v2246
      %vm2255 = vcmask 89088
      %v2257 = vsel %vm2255, %v2251, 0
      %v2260 = vsel %vm2255, %v2252, 0
      %v2263 = vsel %vm2255, %v2253, 0
      %v2266 = vsel %vm2255, %v2254, 0
      %vm2268 = vcmask 1042432
      %v2270 = vsel %vm2268, %v2214, 0
      %2272 = vmatprep.subr.mxu0 0.0
      %2273 = vmatpush1.msra.mxu0 %v2213
      %2274 = vmatprep.subr.mxu0 0.0
      %2275 = vmatpush1.msra.mxu0 %v2270
      %2276 = vmatprep.subr.mxu0 0.0
      %2277 = vmatpush1.msra.mxu0 0.0
      %2278 = vmatprep.subr.mxu0 0.0
      %2279 = vmatpush1.msra.mxu0 0.0
      %2280 = vmatprep.subr.mxu0 0.0
      %2281 = vmatpush1.msra.mxu0 0.0
      %2282 = vmatprep.subr.mxu0 0.0
      %2283 = vmatpush1.msra.mxu0 0.0
      %2284 = vmatprep.subr.mxu0 0.0
      %2285 = vmatpush1.msra.mxu0 0.0
      %2286 = vmatprep.subr.mxu0 0.0
      %2287 = vmatpush1.msra.mxu0 0.0
      %2288 = vmatprep.subr.mxu0 0.0
      %2289 = vmatpush1.msra.mxu0 0.0
      %2290 = vmatprep.subr.mxu0 0.0
      %2291 = vmatpush1.msra.mxu0 0.0
      %2292 = vmatprep.subr.mxu0 0.0
      %2293 = vmatpush1.msra.mxu0 0.0
      %2294 = vmatprep.subr.mxu0 0.0
      %2295 = vmatpush1.msra.mxu0 0.0
      %2296 = vmatprep.subr.mxu0 0.0
      %2297 = vmatpush1.msra.mxu0 0.0
      %2298 = vmatprep.subr.mxu0 0.0
      %2299 = vmatpush1.msra.mxu0 0.0
      %2300 = vmatprep.subr.mxu0 0.0
      %2301 = vmatpush1.msra.mxu0 0.0
      %2302 = vmatprep.subr.mxu0 0.0
      %2303 = vmatpush1.msra.mxu0 0.0
      %2304 = vmatprep.subr.mxu0 0.0
      %2305 = vmatpush1.msra.mxu0 0.0
      %2306 = vmatprep.subr.mxu0 0.0
      %2307 = vmatpush1.msra.mxu0 0.0
      %2308 = vmatprep.subr.mxu0 0.0
      %2309 = vmatpush1.msra.mxu0 0.0
      %2310 = vmatprep.subr.mxu0 0.0
      %2311 = vmatpush1.msra.mxu0 0.0
      %2312 = vmatprep.subr.mxu0 0.0
      %2313 = vmatpush1.msra.mxu0 0.0
      %2314 = vmatprep.subr.mxu0 0.0
      %2315 = vmatpush1.msra.mxu0 0.0
      %2316 = vmatprep.subr.mxu0 0.0
      %2317 = vmatpush1.msra.mxu0 0.0
      %2318 = vmatprep.subr.mxu0 0.0
      %2319 = vmatpush1.msra.mxu0 0.0
      %2320 = vmatprep.subr.mxu0 0.0
      %2321 = vmatpush1.msra.mxu0 0.0
      %2322 = vmatprep.subr.mxu0 0.0
      %2323 = vmatpush1.msra.mxu0 0.0
      %2324 = vmatprep.subr.mxu0 0.0
      %2325 = vmatpush1.msra.mxu0 0.0
      %2326 = vmatprep.subr.mxu0 0.0
      %2327 = vmatpush1.msra.mxu0 0.0
      %2328 = vmatprep.subr.mxu0 0.0
      %2329 = vmatpush1.msra.mxu0 0.0
      %2330 = vmatprep.subr.mxu0 0.0
      %2331 = vmatpush1.msra.mxu0 0.0
      %2332 = vmatprep.subr.mxu0 0.0
      %2333 = vmatpush1.msra.mxu0 0.0
      %2334 = vmatprep.subr.mxu0 0.0
      %2335 = vmatpush1.msra.mxu0 0.0
      %2336 = vmatprep.mubr.f32.mxu0 0.0
      %2337 = vmatmul.mubr.f32.gmra.mrb[0].mxu0 %v2257
      %v2338 = vpop.f32.mrb[0].mxu0
      %v2339 = vadd.f32 0.0, %v2338
      %v2340 = vpop.f32.mrb[0].mxu0
      %2341 = vmatprep.mubr.f32.mxu0 0.0
      %2342 = vmatmul.mubr.f32.gmra.mrb[0].mxu0 %v2260
      %v2343 = vpop.f32.mrb[0].mxu0
      %v2344 = vadd.f32 0.0, %v2343
      %v2345 = vpop.f32.mrb[0].mxu0
      %2346 = vmatprep.mubr.f32.mxu0 0.0
      %2347 = vmatmul.mubr.f32.gmra.mrb[0].mxu0 %v2263
      %v2348 = vpop.f32.mrb[0].mxu0
      %v2349 = vadd.f32 0.0, %v2348
      %v2350 = vpop.f32.mrb[0].mxu0
      %2351 = vmatprep.mubr.f32.mxu0 0.0
      %2352 = vmatmul.mubr.f32.gmra.mrb[0].mxu0 %v2266
      %v2353 = vpop.f32.mrb[0].mxu0
      %v2354 = vadd.f32 0.0, %v2353
      %v2355 = vpop.f32.mrb[0].mxu0
      %2356 = vdwg.mxu0
      %vm2357 = vcmask 31744
      %2358 = vst.msk [vmem:[%s521] sm:$0xff] %vm2357, %v2339
      %2359 = vst.msk [vmem:[%s521 + $0x8] sm:$0xff] %vm2357, %v2344
      %2360 = vst.msk [vmem:[%s521 + $0x10] sm:$0xff] %vm2357, %v2349
      %2361 = vst.msk [vmem:[%s521 + $0x18] sm:$0xff] %vm2357, %v2354
      %p2362 = scmp.lt.s32.totalorder %s27, 1
      %s2363 = scalar_select %p2362, %s27, 1
      %s2364 = smul.addr %s2363, 4
      %s2365 = smul.addr %s2364, 8
      %s2366 = scalar_lea.vmem %s16, %s2365
      // Predicated region
      $region85: #{my_vgg_forward.1} parent=83 // pred_check
        %p2367 = pneg %p386
      $region86: #{my_vgg_forward.1} parent=83 // pred_check_branch
        %2369 = sbr.rel (%p2367) target = $region88
      $region87: #{my_vgg_forward.1} parent=83 // pred_region
        _
      $region88: #{my_vgg_forward.1} parent=83 // pred_fallthru
        _
    $region84: #{my_vgg_forward.1} parent=5 // pred_fallthru
      _
    %p2370 = scmp.le.s32.totalorder 2, %s22
    // Predicated region
    $region89: #{my_vgg_forward.1} parent=5 // pred_check
      %p2371 = pneg %p2370
    $region90: #{my_vgg_forward.1} parent=5 // pred_check_branch
      %2373 = sbr.rel (%p2371) target = $region92
    $region91: #{my_vgg_forward.1} parent=5 // pred_region
      %s2374 = ssub.s32 %s22, 2
      // Predicated region
      $region93: #{my_vgg_forward.1} parent=91 // pred_check
        %p2375 = pneg %p392
      $region94: #{my_vgg_forward.1} parent=91 // pred_check_branch
        %2377 = sbr.rel (%p2375) target = $region96
      $region95: #{my_vgg_forward.1} parent=91 // pred_region
        %p2378 = scmp.lt.s32.totalorder %s28, 1
        %s2379 = scalar_select %p2378, %s28, 1
        %s2380 = smul.addr %s2379, 4
        %s2381 = smul.addr %s2380, 8
        %s2382 = scalar_lea.vmem %s16, %s2381
      $region96: #{my_vgg_forward.1} parent=91 // pred_fallthru
        _
    $region92: #{my_vgg_forward.1} parent=5 // pred_fallthru
      _
  $region6: #{my_vgg_forward.1} parent=0 // loop_footer
    %s26 = sadd.s32 1, %s22
  $region7: #{my_vgg_forward.1} parent=0 // loop_footer_branch
    %21 = sbr.rel target = $region3
  $region8: #{my_vgg_forward.1} parent=0 // loop_exit
    _

</llo_original>
